<compile_context>
chip_gen: v6e
topology: v6e:2x2x1
jax: 0.10.0
libtpu: 0.0.40
codegen_flags: <defaults>
</compile_context>

<pallas_src>
import functools

import jax
import jax.numpy as jnp
from jax.experimental import pallas as pl
from jax.experimental.pallas import tpu as pltpu

LANE = 128
TM = 256        # M (rows) tile target
TK_MAX = 512    # K (reduction) tile upper bound
TN_MAX = 256    # N (cout) tile upper bound (MXU-matched on v6e/v7x)


def _round_up(x, m):
    return (x + m - 1) // m * m


def _pick_tile(total, maximum):
    """Largest multiple of 128 that is <= maximum and divides `total`.

    `total` is always a multiple of 128, so 128 is a valid fallback."""
    t = min(maximum, total)
    t = (t // LANE) * LANE
    while total % t != 0:
        t -= LANE
    return t


# --------------------------- Pallas kernels ---------------------------------

def _matmul_bn_kernel(x_ref, w_ref, scale_ref, shift_ref, o_ref, acc_ref, *, relu):
    k = pl.program_id(2)

    @pl.when(k == 0)
    def _():
        acc_ref[...] = jnp.zeros_like(acc_ref)

    acc_ref[...] += jnp.dot(x_ref[...], w_ref[...],
                            preferred_element_type=jnp.float32)

    @pl.when(k == pl.num_programs(2) - 1)
    def _():
        y = acc_ref[...] * scale_ref[...] + shift_ref[...]
        if relu:
            y = jnp.maximum(y, 0.0)
        o_ref[...] = y.astype(o_ref.dtype)


def _matmul_bn_res_kernel(x_ref, w_ref, scale_ref, shift_ref, res_ref, o_ref,
                          acc_ref, *, relu):
    k = pl.program_id(2)

    @pl.when(k == 0)
    def _():
        acc_ref[...] = jnp.zeros_like(acc_ref)

    acc_ref[...] += jnp.dot(x_ref[...], w_ref[...],
                            preferred_element_type=jnp.float32)

    @pl.when(k == pl.num_programs(2) - 1)
    def _():
        y = (acc_ref[...] * scale_ref[...] + shift_ref[...]
             + res_ref[...].astype(jnp.float32))
        if relu:
            y = jnp.maximum(y, 0.0)
        o_ref[...] = y.astype(o_ref.dtype)


def _pool_fc_kernel(x_ref, w_ref, b_ref, o_ref):
    # x: (N, S, C); AdaptiveAvgPool3d((1,1,1)) == mean over S, then Linear.
    pooled = jnp.mean(x_ref[...].astype(jnp.float32), axis=1)
    o_ref[...] = jnp.dot(pooled.astype(jnp.bfloat16), w_ref[...],
                         preferred_element_type=jnp.float32) + b_ref[...]


# ------------------------- Pallas call wrappers ------------------------------

def matmul_bn_act(x, w, scale, shift, cout, *, relu, residual=None,
                  out_dtype=jnp.bfloat16):
    """y = act((x @ w) * scale + shift [+ residual]) with an M/N/K tiled grid.

    x:      (M, K)  unpadded activations (any float dtype, cast to bf16)
    w:      (Kp, Cp) bf16, K and cout pre-padded to multiples of 128
    scale:  (1, Cp) f32 (zero in padded columns)
    shift:  (1, Cp) f32 (zero in padded columns)
    residual: optional (M, cout)
    returns (M, cout) in out_dtype.
    """
    m, k_dim = x.shape
    kp, cp = w.shape

    if m <= TM:
        tm, mp = m, m                      # single full-M block (exempt from 8-align)
    else:
        tm = TM
        mp = _round_up(m, TM)

    tk = _pick_tile(kp, TK_MAX)
    tn = _pick_tile(cp, TN_MAX)

    x = x.astype(jnp.bfloat16)
    if mp != m or kp != k_dim:
        x = jnp.pad(x, ((0, mp - m), (0, kp - k_dim)))

    in_specs = [
        pl.BlockSpec((tm, tk), lambda i, j, k: (i, k)),
        pl.BlockSpec((tk, tn), lambda i, j, k: (k, j)),
        pl.BlockSpec((1, tn), lambda i, j, k: (0, j)),
        pl.BlockSpec((1, tn), lambda i, j, k: (0, j)),
    ]
    args = [x, w, scale, shift]

    if residual is not None:
        r = residual.astype(jnp.bfloat16)
        if mp != m or cp != cout:
            r = jnp.pad(r, ((0, mp - m), (0, cp - cout)))
        args.append(r)
        in_specs.append(pl.BlockSpec((tm, tn), lambda i, j, k: (i, j)))
        kernel = functools.partial(_matmul_bn_res_kernel, relu=relu)
    else:
        kernel = functools.partial(_matmul_bn_kernel, relu=relu)

    out = pl.pallas_call(
        kernel,
        out_shape=jax.ShapeDtypeStruct((mp, cp), out_dtype),
        grid_spec=pltpu.PrefetchScalarGridSpec(
            num_scalar_prefetch=0,
            grid=(mp // tm, cp // tn, kp // tk),
            in_specs=in_specs,
            out_specs=pl.BlockSpec((tm, tn), lambda i, j, k: (i, j)),
            scratch_shapes=[pltpu.VMEM((tm, tn), jnp.float32)],
        ),
        compiler_params=pltpu.CompilerParams(
            dimension_semantics=("parallel", "parallel", "arbitrary")),
    )(*args)

    if mp != m or cp != cout:
        out = out[:m, :cout]
    return out


def pool_fc(feat, w, b, num_classes):
    n = feat.shape[0]
    ncp = w.shape[1]
    out = pl.pallas_call(
        _pool_fc_kernel,
        out_shape=jax.ShapeDtypeStruct((n, ncp), jnp.float32),
        in_specs=[pl.BlockSpec(memory_space=pltpu.MemorySpace.VMEM)] * 3,
        out_specs=pl.BlockSpec(memory_space=pltpu.MemorySpace.VMEM),
    )(feat, w, b)
    return out[:, :num_classes]


# ----------------------------- JAX glue --------------------------------------

def _im2col(x, ksize, stride, pad):
    """x: (N, T, H, W, C) -> (N*To*Ho*Wo, kt*kh*kw*C) patches (PyTorch conv semantics)."""
    kt, kh, kw = ksize
    st, sh, sw = stride
    pt, ph, pw = pad
    n, t, h, w, _ = x.shape
    xp = jnp.pad(x, ((0, 0), (pt, pt), (ph, ph), (pw, pw), (0, 0)))
    to = (t + 2 * pt - kt) // st + 1
    ho = (h + 2 * ph - kh) // sh + 1
    wo = (w + 2 * pw - kw) // sw + 1
    taps = []
    for a in range(kt):
        for b in range(kh):
            for c in range(kw):
                taps.append(xp[:, a:a + to * st:st, b:b + ho * sh:sh,
                               c:c + wo * sw:sw, :])
    patches = jnp.stack(taps, axis=4)                      # (N,To,Ho,Wo,taps,C)
    patches = patches.reshape(n * to * ho * wo, kt * kh * kw * x.shape[-1])
    return patches, (n, to, ho, wo)


def _conv_bn(x, stage, *, relu, residual=None):
    patches, (n, to, ho, wo) = _im2col(x, stage["ksize"], stage["stride"],
                                       stage["pad"])
    cout = stage["cout"]
    res2d = None if residual is None else residual.reshape(-1, cout)
    y = matmul_bn_act(patches, stage["w2d"], stage["scale"], stage["shift"],
                      cout, relu=relu, residual=res2d)
    return y.reshape(n, to, ho, wo, cout)


def _run_unit(x, stages, *, residual):
    # conv_builder (with inner BN/ReLU for R(2+1)D) followed by the block's
    # outer BN; `residual` (if any) is added just before the final ReLU.
    last = len(stages) - 1
    for i, st in enumerate(stages):
        x = _conv_bn(x, st, relu=True,
                     residual=residual if i == last else None)
    return x


def _run_block(x, block):
    if block["down"] is not None:
        res = _conv_bn(x, block["down"], relu=False)
    else:
        res = x
    out = _run_unit(x, block["conv1"], residual=None)
    out = _run_unit(out, block["conv2"], residual=res)
    return out


# --------------------------- parameter init ----------------------------------

class _KeyGen:
    def __init__(self, key):
        self._key = key
        self._i = 0

    def __call__(self):
        self._i += 1
        return jax.random.fold_in(self._key, self._i)


def _make_stage(kg, cin, cout, ksize, stride, pad):
    kt, kh, kw = ksize
    k_dim = kt * kh * kw * cin
    kp = _round_up(k_dim, LANE)
    cp = _round_up(cout, LANE)

    fan_in = cin * kt * kh * kw
    w = jax.random.normal(kg(), (cout, cin, kt, kh, kw), jnp.float32)
    w = w * (2.0 / fan_in) ** 0.5                     # kaiming-normal-style
    w2d = jnp.transpose(w, (2, 3, 4, 1, 0)).reshape(k_dim, cout)
    w2d = jnp.pad(w2d, ((0, kp - k_dim), (0, cp - cout))).astype(jnp.bfloat16)

    gamma = jax.random.uniform(kg(), (cout,), minval=0.8, maxval=1.2)
    beta = jax.random.normal(kg(), (cout,)) * 0.05
    rmean = jax.random.normal(kg(), (cout,)) * 0.05
    rvar = jax.random.uniform(kg(), (cout,), minval=0.8, maxval=1.2)
    scale = gamma / jnp.sqrt(rvar + 1e-5)             # eval-mode BN folding
    shift = beta - rmean * scale
    scale = jnp.pad(scale.reshape(1, cout),
                    ((0, 0), (0, cp - cout))).astype(jnp.float32)
    shift = jnp.pad(shift.reshape(1, cout),
                    ((0, 0), (0, cp - cout))).astype(jnp.float32)

    return {"w2d": w2d, "ksize": ksize, "stride": stride, "pad": pad,
            "cout": cout, "scale": scale, "shift": shift}


def _conv3d_simple(kg, cin, cout, mid, s):
    return [_make_stage(kg, cin, cout, (3, 3, 3), (s, s, s), (1, 1, 1))]


def _conv3d_no_temporal(kg, cin, cout, mid, s):
    return [_make_stage(kg, cin, cout, (1, 3, 3), (1, s, s), (0, 1, 1))]


def _conv2plus1d(kg, cin, cout, mid, s):
    return [_make_stage(kg, cin, mid, (1, 3, 3), (1, s, s), (0, 1, 1)),
            _make_stage(kg, mid, cout, (3, 1, 1), (s, 1, 1), (1, 0, 0))]


_MODEL_CFG = {
    "resnet18":    ([_conv3d_simple] * 4,
                    [lambda s: (s, s, s)] * 4, "basic"),
    "mc3_18":      ([_conv3d_simple] + [_conv3d_no_temporal] * 3,
                    [lambda s: (s, s, s)] + [lambda s: (1, s, s)] * 3, "basic"),
    "r2plus1d_18": ([_conv2plus1d] * 4,
                    [lambda s: (s, s, s)] * 4, "r2plus1d"),
}


def init_video_resnet(key, model_name, num_classes=400):
    assert model_name in _MODEL_CFG
    kg = _KeyGen(key)
    conv_makers, ds_strides, stem_kind = _MODEL_CFG[model_name]

    if stem_kind == "r2plus1d":
        stem = [_make_stage(kg, 3, 45, (1, 7, 7), (1, 2, 2), (0, 3, 3)),
                _make_stage(kg, 45, 64, (3, 1, 1), (1, 1, 1), (1, 0, 0))]
    else:
        stem = [_make_stage(kg, 3, 64, (3, 7, 7), (1, 2, 2), (1, 3, 3))]

    layers = []
    inplanes = 64
    for i, (maker, ds_fn, nblocks) in enumerate(
            zip(conv_makers, ds_strides, [2, 2, 2, 2])):
        planes = 64 * (2 ** i)
        layer_stride = 1 if i == 0 else 2
        layer = []
        for b in range(nblocks):
            s = layer_stride if b == 0 else 1
            mid = (inplanes * planes * 3 * 3 * 3) // (inplanes * 3 * 3 + 3 * planes)
            block = {"conv1": maker(kg, inplanes, planes, mid, s),
                     "conv2": maker(kg, planes, planes, mid, 1),
                     "down": None}
            if s != 1 or inplanes != planes:
                block["down"] = _make_stage(kg, inplanes, planes, (1, 1, 1),
                                            ds_fn(s), (0, 0, 0))
            layer.append(block)
            inplanes = planes
        layers.append(layer)

    ncp = _round_up(num_classes, LANE)
    fc_w = jax.random.normal(kg(), (512, num_classes), jnp.float32) * 0.01
    fc_w = jnp.pad(fc_w, ((0, 0), (0, ncp - num_classes))).astype(jnp.bfloat16)
    fc_b = jnp.zeros((1, ncp), jnp.float32)
    return {"stem": stem, "layers": layers, "fc_w": fc_w, "fc_b": fc_b,
            "num_classes": num_classes}


# ------------------------------- model ---------------------------------------

class VideoResNetPallas:
    """Mirrors VideoResNet(model_name).forward -> {'output': logits}."""

    def __init__(self, model_name, num_classes=400, key=None):
        key = jax.random.PRNGKey(0) if key is None else key
        self.params = init_video_resnet(key, model_name, num_classes)

    def __call__(self, x):
        # x: (N, C, T, H, W) float, PyTorch NCDHW convention.
        x = jnp.transpose(x, (0, 2, 3, 4, 1)).astype(jnp.bfloat16)  # -> NDHWC
        p = self.params
        for st in p["stem"]:
            x = _conv_bn(x, st, relu=True)
        for layer in p["layers"]:
            for block in layer:
                x = _run_block(x, block)
        n, t, h, w, c = x.shape
        feat = x.reshape(n, t * h * w, c)
        out = pool_fc(feat, p["fc_w"], p["fc_b"], p["num_classes"])
        return {"output": out}


# -------------------------------- main ----------------------------------------

if __name__ == "__main__":
    key = jax.random.PRNGKey(0)
    pkey, xkey = jax.random.split(key)

    model = VideoResNetPallas("resnet18", num_classes=400, key=pkey)
    x = jax.random.normal(xkey, (2, 3, 4, 16, 16), jnp.float32)  # (N, C, T, H, W)

    out = model(x)
    jax.block_until_ready(out["output"])

    assert out["output"].shape == (2, 400), out["output"].shape
    assert bool(jnp.all(jnp.isfinite(out["output"])))
    print("KERNEL_OK")
</pallas_src>

<mosaic_0001>
module attributes {stable_mosaic.version = 11 : i64} {
  func.func @_matmul_bn_kernel(%arg0: i32, %arg1: i32, %arg2: i32, %arg3: memref<256x512xbf16, #tpu.memory_space<vmem>>, %arg4: memref<512x128xbf16, #tpu.memory_space<vmem>>, %arg5: memref<1x128xf32, #tpu.memory_space<vmem>>, %arg6: memref<1x128xf32, #tpu.memory_space<vmem>>, %arg7: memref<256x128xbf16, #tpu.memory_space<vmem>>, %arg8: memref<256x128xf32, #tpu.memory_space<vmem>>) attributes {dimension_semantics = [#tpu.dimension_semantics<parallel>, #tpu.dimension_semantics<parallel>, #tpu.dimension_semantics<arbitrary>], iteration_bounds = array<i64: 2, 1, 1>, scalar_prefetch = 0 : i64, scratch_operands = 1 : i64, tpu.core_type = #tpu.core_type<tc>, window_params = [{transform_indices = @transform_0, window_bounds = array<i64: 256, 512>}, {transform_indices = @transform_1, window_bounds = array<i64: 512, 128>}, {transform_indices = @transform_2, window_bounds = array<i64: 1, 128>}, {transform_indices = @transform_3, window_bounds = array<i64: 1, 128>}, {transform_indices = @transform_4, window_bounds = array<i64: 256, 128>}]} {
    %c0_i32 = arith.constant 0 : i32
    %0 = arith.cmpi eq, %arg2, %c0_i32 : i32
    %1 = arith.extui %0 : i1 to i32
    %c0_i32_0 = arith.constant 0 : i32
    %2 = arith.cmpi ne, %1, %c0_i32_0 : i32
    scf.if %2 {
      %cst_10 = arith.constant 0.000000e+00 : f32
      %12 = vector.broadcast %cst_10 : f32 to vector<256x128xf32>
      %c0_11 = arith.constant 0 : index
      %c0_12 = arith.constant 0 : index
      %13 = vector.load %arg8[%c0_11, %c0_12] : memref<256x128xf32, #tpu.memory_space<vmem>>, vector<256x128xf32>
      tpu.vector_store %arg8[%c0_11, %c0_12], %12 {strides = array<i32>} : memref<256x128xf32, #tpu.memory_space<vmem>>, vector<256x128xf32>,
    } else {
    }
    %c0 = arith.constant 0 : index
    %c0_1 = arith.constant 0 : index
    %3 = vector.load %arg8[%c0, %c0_1] : memref<256x128xf32, #tpu.memory_space<vmem>>, vector<256x128xf32>
    %c0_2 = arith.constant 0 : index
    %c0_3 = arith.constant 0 : index
    %4 = vector.load %arg3[%c0_2, %c0_3] : memref<256x512xbf16, #tpu.memory_space<vmem>>, vector<256x512xbf16>
    %c0_4 = arith.constant 0 : index
    %c0_5 = arith.constant 0 : index
    %5 = vector.load %arg4[%c0_4, %c0_5] : memref<512x128xbf16, #tpu.memory_space<vmem>>, vector<512x128xbf16>
    %cst = arith.constant dense<0.000000e+00> : vector<256x128xf32>
    %6 = tpu.matmul %4, %5, %cst {dimension_numbers = #tpu.dot_dimension_numbers<[1], [0], [0], [1], [0, 0, 1, 1], [], []>} : vector<256x512xbf16>, vector<512x128xbf16>, vector<256x128xf32> -> vector<256x128xf32>
    %7 = arith.addf %3, %6 : vector<256x128xf32>
    %c0_6 = arith.constant 0 : index
    %c0_7 = arith.constant 0 : index
    %8 = vector.load %arg8[%c0_6, %c0_7] : memref<256x128xf32, #tpu.memory_space<vmem>>, vector<256x128xf32>
    tpu.vector_store %arg8[%c0_6, %c0_7], %7 {strides = array<i32>} : memref<256x128xf32, #tpu.memory_space<vmem>>, vector<256x128xf32>,
    %c0_i32_8 = arith.constant 0 : i32
    %9 = arith.cmpi eq, %arg2, %c0_i32_8 : i32
    %10 = arith.extui %9 : i1 to i32
    %c0_i32_9 = arith.constant 0 : i32
    %11 = arith.cmpi ne, %10, %c0_i32_9 : i32
    scf.if %11 {
      %c0_10 = arith.constant 0 : index
      %c0_11 = arith.constant 0 : index
      %12 = vector.load %arg8[%c0_10, %c0_11] : memref<256x128xf32, #tpu.memory_space<vmem>>, vector<256x128xf32>
      %c0_12 = arith.constant 0 : index
      %c0_13 = arith.constant 0 : index
      %13 = vector.load %arg5[%c0_12, %c0_13] : memref<1x128xf32, #tpu.memory_space<vmem>>, vector<1x128xf32>
      %14 = vector.broadcast %13 : vector<1x128xf32> to vector<256x128xf32>
      %15 = arith.mulf %12, %14 : vector<256x128xf32>
      %c0_14 = arith.constant 0 : index
      %c0_15 = arith.constant 0 : index
      %16 = vector.load %arg6[%c0_14, %c0_15] : memref<1x128xf32, #tpu.memory_space<vmem>>, vector<1x128xf32>
      %17 = vector.broadcast %16 : vector<1x128xf32> to vector<256x128xf32>
      %18 = arith.addf %15, %17 : vector<256x128xf32>
      %cst_16 = arith.constant 0.000000e+00 : f32
      %19 = vector.broadcast %cst_16 : f32 to vector<256x128xf32>
      %20 = arith.maximumf %18, %19 : vector<256x128xf32>
      %21 = arith.truncf %20 : vector<256x128xf32> to vector<256x128xbf16>
      %c0_17 = arith.constant 0 : index
      %c0_18 = arith.constant 0 : index
      %22 = vector.load %arg7[%c0_17, %c0_18] : memref<256x128xbf16, #tpu.memory_space<vmem>>, vector<256x128xbf16>
      tpu.vector_store %arg7[%c0_17, %c0_18], %21 {strides = array<i32>} : memref<256x128xbf16, #tpu.memory_space<vmem>>, vector<256x128xbf16>,
    } else {
    }
    return
  }
  func.func @transform_0(%arg0: i32, %arg1: i32, %arg2: i32) -> (i32, i32) {
    %c0_i32 = arith.constant 0 : i32
    return %arg0, %arg2 : i32, i32
  }
  func.func @transform_1(%arg0: i32, %arg1: i32, %arg2: i32) -> (i32, i32) {
    %c0_i32 = arith.constant 0 : i32
    return %arg2, %arg1 : i32, i32
  }
  func.func @transform_2(%arg0: i32, %arg1: i32, %arg2: i32) -> (i32, i32) {
    %c0_i32 = arith.constant 0 : i32
    %c0_i32_0 = arith.constant 0 : i32
    return %c0_i32, %arg1 : i32, i32
  }
  func.func @transform_3(%arg0: i32, %arg1: i32, %arg2: i32) -> (i32, i32) {
    %c0_i32 = arith.constant 0 : i32
    %c0_i32_0 = arith.constant 0 : i32
    return %c0_i32, %arg1 : i32, i32
  }
  func.func @transform_4(%arg0: i32, %arg1: i32, %arg2: i32) -> (i32, i32) {
    %c0_i32 = arith.constant 0 : i32
    return %arg0, %arg1 : i32, i32
  }
}

</mosaic_0001>

<llo_original>
// kernel: tpu_custom_call.1
$region0: #{tpu_custom_call.1}
  #allocation0 [shape = 'u32[]', space=smem, size = 0x4, offset = 0x4, fixed_abs, tag = 'smem constant byte address 0x4 - core index']
  #allocation1 [shape = 'u32[144,128]{1,0:T(1,128)}', space=vmem, size = 0x12000, scoped, tag = 'internal scratch']
  #allocation2 [shape = 'f32[256,128]{1,0:T(8,128)}', space=vmem, size = 0x20000, scoped, tag = 'scratch operand']
  %s0 = inlined_call_operand.hbm [shape: bf16[512,512], index: 0, kind: input, shape index: {}]
  %s1 = inlined_call_operand.hbm [shape: bf16[512,128], index: 1, kind: input, shape index: {}]
  %s2 = inlined_call_operand.vmem [shape: f32[1,128], index: 2, kind: input, shape index: {}]
  %s3 = inlined_call_operand.vmem [shape: f32[1,128], index: 3, kind: input, shape index: {}]
  %s4 = inlined_call_operand.hbm [shape: bf16[512,128], index: 4, kind: output, shape index: {}]
  %s5 = sld [smem:[#allocation0]]
  $region65: #{tpu_custom_call.1} parent=0
    _
  %s7 = ssub.s32 1, %s5
  %s8 = scalar_select 0, %s7, %s5
  $region1: #{tpu_custom_call.1} parent=0
    #allocation3 [shape = 'u8[524288]{0}', space=vmem, size = 0x80000, scoped, tag = 'input window, operand 0']
    #allocation4 [shape = 's32[2]{0}', space=sflag, size = 0x8, scoped, tag = 'scoped memory for tpu_custom_call.1']
    #allocation5 [shape = 's32[2]{0}', space=sflag, size = 0x8, scoped, tag = 'scoped memory for tpu_custom_call.1']
    #allocation6 [shape = 'u8[131072]{0}', space=vmem, size = 0x20000, scoped, tag = 'input window, operand 1, single buffered']
    #allocation7 [shape = 's32[1]{0}', space=sflag, size = 0x4, scoped, tag = 'scoped memory for tpu_custom_call.1']
    #allocation8 [shape = 'u8[131072]{0}', space=vmem, size = 0x20000, scoped, tag = 'output window, operand 0']
    %9 = vsyncpa [#allocation4], 0
    %s10 = scalar_lea.sflag [#allocation4], 1
    %11 = vsyncpa %s10, 0
    %12 = vsyncpa [#allocation7], 0
    %13 = vsyncpa [#allocation5], 0
    %s14 = scalar_lea.sflag [#allocation5], 1
    %15 = vsyncpa %s14, 0
    loop: start=0, step=1, limit=4
    $region2: #{tpu_custom_call.1} parent=1 // loop_pre_header
      _
    $region3: #{tpu_custom_call.1} parent=1 // loop_header
      %s17 = sphi 0, %s21
      %p18 = scmp.ge.s32.totalorder %s17, 4
      %s24 = sphi 0, %s43
      %s25 = sphi 0, %s39
      %s26 = sphi 0, %s35
      %s27 = sphi 0, %s24
      %s28 = sphi 0, %s25
      %s29 = sphi 0, %s26
      %s30 = sphi 0, %s27
      %s31 = sphi 0, %s28
      %s32 = sphi 0, %s29
      %s48 = sphi 0, %s50
      %s51 = sphi 0, %s48
      %s52 = sphi 0, %s51
      %s68 = sphi 0, %s52
      %s76 = sphi 0, %s78
      %s79 = sphi 0, %s76
      %s80 = sphi 0, %s79
      %s96 = sphi 0, %s80
      %s102 = sphi 0, %s104
      %s105 = sphi 0, %s102
      %s106 = sphi 0, %s105
      %s122 = sphi 0, %s106
      %s128 = sphi 0, %s130
      %s131 = sphi 0, %s128
      %s132 = sphi 0, %s131
      %s148 = sphi 0, %s132
      %s156 = sphi 0, %s158
      %s159 = sphi 0, %s156
      %s160 = sphi 0, %s159
      %s176 = sphi 0, %s160
    $region4: #{tpu_custom_call.1} parent=1 // loop_header_branch
      %20 = sbr.rel (%p18) target = $region8
    $region5: #{tpu_custom_call.1} parent=1 // loop_body
      %s22 = ssub.s32 %s17, 1
      %s23 = ssub.s32 %s17, 2
      %s33 = sadd.s32 1, %s26
      %p34 = scmp.ge.s32.totalorder %s33, 1
      %s35 = scalar_select %p34, 0, %s33
      %s36 = sadd.s32 1, %s25
      %s37 = scalar_select %p34, %s36, %s25
      %p38 = scmp.ge.s32.totalorder %s37, 1
      %s39 = scalar_select %p38, 0, %s37
      %s40 = sadd.s32 1, %s24
      %s41 = scalar_select %p38, %s40, %s24
      %p42 = scmp.ge.s32.totalorder %s41, 2
      %s43 = scalar_select %p42, 0, %s41
      %s44 = ssub.s32 %s24, %s43
      %s45 = ssub.s32 %s26, %s35
      %s46 = sor.u32 %s44, %s45
      %p47 = scmp.eq.s32.totalorder %s46, 0
      %s49 = sadd.s32 %s48, 1
      %s50 = scalar_select %p47, %s48, %s49
      %p53 = pneg %p47
      %p54 = scmp.eq.s32.totalorder %s17, 1
      %p55 = por %p53, %p54
      %p56 = scmp.ne.s32.totalorder %s48, %s51
      %p57 = scmp.eq.s32.totalorder %s17, 0
      %p58 = por %p56, %p57
      %p59 = scmp.ne.s32.totalorder %s48, %s51
      %p60 = scmp.eq.s32.totalorder %s22, 1
      %p61 = por %p59, %p60
      %p62 = scmp.ne.s32.totalorder %s51, %s52
      %p63 = scmp.eq.s32.totalorder %s22, 0
      %p64 = por %p62, %p63
      %p65 = scmp.ne.s32.totalorder %s51, %s52
      %p66 = scmp.eq.s32.totalorder %s23, 1
      %p67 = por %p65, %p66
      %p69 = scmp.ne.s32.totalorder %s52, %s68
      %p70 = scmp.eq.s32.totalorder %s23, 0
      %p71 = por %p69, %p70
      %s72 = ssub.s32 %s26, %s35
      %s73 = ssub.s32 %s25, %s39
      %s74 = sor.u32 %s72, %s73
      %p75 = scmp.eq.s32.totalorder %s74, 0
      %s77 = sadd.s32 %s76, 1
      %s78 = scalar_select %p75, %s76, %s77
      %p81 = pneg %p75
      %p82 = scmp.eq.s32.totalorder %s17, 1
      %p83 = por %p81, %p82
      %p84 = scmp.ne.s32.totalorder %s76, %s79
      %p85 = scmp.eq.s32.totalorder %s17, 0
      %p86 = por %p84, %p85
      %p87 = scmp.ne.s32.totalorder %s76, %s79
      %p88 = scmp.eq.s32.totalorder %s22, 1
      %p89 = por %p87, %p88
      %p90 = scmp.ne.s32.totalorder %s79, %s80
      %p91 = scmp.eq.s32.totalorder %s22, 0
      %p92 = por %p90, %p91
      %p93 = scmp.ne.s32.totalorder %s79, %s80
      %p94 = scmp.eq.s32.totalorder %s23, 1
      %p95 = por %p93, %p94
      %p97 = scmp.ne.s32.totalorder %s80, %s96
      %p98 = scmp.eq.s32.totalorder %s23, 0
      %p99 = por %p97, %p98
      %s100 = ssub.s32 %s25, %s39
      %p101 = scmp.eq.s32.totalorder %s100, 0
      %s103 = sadd.s32 %s102, 1
      %s104 = scalar_select %p101, %s102, %s103
      %p107 = pneg %p101
      %p108 = scmp.eq.s32.totalorder %s17, 1
      %p109 = por %p107, %p108
      %p110 = scmp.ne.s32.totalorder %s102, %s105
      %p111 = scmp.eq.s32.totalorder %s17, 0
      %p112 = por %p110, %p111
      %p113 = scmp.ne.s32.totalorder %s102, %s105
      %p114 = scmp.eq.s32.totalorder %s22, 1
      %p115 = por %p113, %p114
      %p116 = scmp.ne.s32.totalorder %s105, %s106
      %p117 = scmp.eq.s32.totalorder %s22, 0
      %p118 = por %p116, %p117
      %p119 = scmp.ne.s32.totalorder %s105, %s106
      %p120 = scmp.eq.s32.totalorder %s23, 1
      %p121 = por %p119, %p120
      %p123 = scmp.ne.s32.totalorder %s106, %s122
      %p124 = scmp.eq.s32.totalorder %s23, 0
      %p125 = por %p123, %p124
      %s126 = ssub.s32 %s25, %s39
      %p127 = scmp.eq.s32.totalorder %s126, 0
      %s129 = sadd.s32 %s128, 1
      %s130 = scalar_select %p127, %s128, %s129
      %p133 = pneg %p127
      %p134 = scmp.eq.s32.totalorder %s17, 1
      %p135 = por %p133, %p134
      %p136 = scmp.ne.s32.totalorder %s128, %s131
      %p137 = scmp.eq.s32.totalorder %s17, 0
      %p138 = por %p136, %p137
      %p139 = scmp.ne.s32.totalorder %s128, %s131
      %p140 = scmp.eq.s32.totalorder %s22, 1
      %p141 = por %p139, %p140
      %p142 = scmp.ne.s32.totalorder %s131, %s132
      %p143 = scmp.eq.s32.totalorder %s22, 0
      %p144 = por %p142, %p143
      %p145 = scmp.ne.s32.totalorder %s131, %s132
      %p146 = scmp.eq.s32.totalorder %s23, 1
      %p147 = por %p145, %p146
      %p149 = scmp.ne.s32.totalorder %s132, %s148
      %p150 = scmp.eq.s32.totalorder %s23, 0
      %p151 = por %p149, %p150
      %s152 = ssub.s32 %s24, %s43
      %s153 = ssub.s32 %s25, %s39
      %s154 = sor.u32 %s152, %s153
      %p155 = scmp.eq.s32.totalorder %s154, 0
      %s157 = sadd.s32 %s156, 1
      %s158 = scalar_select %p155, %s156, %s157
      %p161 = pneg %p155
      %p162 = scmp.eq.s32.totalorder %s17, 1
      %p163 = por %p161, %p162
      %p164 = scmp.ne.s32.totalorder %s156, %s159
      %p165 = scmp.eq.s32.totalorder %s17, 0
      %p166 = por %p164, %p165
      %p167 = scmp.ne.s32.totalorder %s156, %s159
      %p168 = scmp.eq.s32.totalorder %s22, 1
      %p169 = por %p167, %p168
      %p170 = scmp.ne.s32.totalorder %s159, %s160
      %p171 = scmp.eq.s32.totalorder %s22, 0
      %p172 = por %p170, %p171
      %p173 = scmp.ne.s32.totalorder %s159, %s160
      %p174 = scmp.eq.s32.totalorder %s23, 1
      %p175 = por %p173, %p174
      %p177 = scmp.ne.s32.totalorder %s160, %s176
      %p178 = scmp.eq.s32.totalorder %s23, 0
      %p179 = por %p177, %p178
      %p180 = scmp.le.s32.totalorder 1, %s17
      %p181 = scmp.lt.s32.totalorder %s17, 3
      %p182 = pnand %p180, %p181
      %p183 = pneg %p182
      // Predicated region
      $region9: #{tpu_custom_call.1} parent=5 // pred_check
        _
      $region10: #{tpu_custom_call.1} parent=5 // pred_check_branch
        %185 = sbr.rel (%p182) target = $region12
      $region11: #{tpu_custom_call.1} parent=5 // pred_region
        %s186 = ssub.s32 %s17, 1
        // Predicated region
        $region13: #{tpu_custom_call.1} parent=11 // pred_check
          %p187 = pneg %p92
        $region14: #{tpu_custom_call.1} parent=11 // pred_check_branch
          %189 = sbr.rel (%p187) target = $region16
        $region15: #{tpu_custom_call.1} parent=11 // pred_region
          %s190 = smul.u32 64, %s29
          %s192 = ssub.s32 4096, 4096
          %193 = vsyncadd [#allocation7], %s192
          %s194 = sadd.s32 %s28, %s190
          %s195 = smul.addr %s194, 64
          %s196 = scalar_lea.hbm %s1, %s195
          %s197 = sshll.u32 [#allocation6], 4
          %s198 = int_to_ptr.vmem [resolvable:$true] %s197
          %203 = dma.hbm_to_vmem [thread:$0]  %s196, 4096, %s198, [#allocation7], 64, 64, 4
        $region16: #{tpu_custom_call.1} parent=11 // pred_fallthru
          _
        // Predicated region
        $region17: #{tpu_custom_call.1} parent=11 // pred_check
          %p204 = pneg %p118
        $region18: #{tpu_custom_call.1} parent=11 // pred_check_branch
          %206 = sbr.rel (%p204) target = $region20
        $region19: #{tpu_custom_call.1} parent=11 // pred_region
          %p207 = scmp.lt.s32.totalorder %s28, 0
          %s208 = scalar_select %p207, %s28, 0
          %s209 = scalar_lea.vmem %s2, %s208
        $region20: #{tpu_custom_call.1} parent=11 // pred_fallthru
          _
        // Predicated region
        $region21: #{tpu_custom_call.1} parent=11 // pred_check
          %p210 = pneg %p144
        $region22: #{tpu_custom_call.1} parent=11 // pred_check_branch
          %212 = sbr.rel (%p210) target = $region24
        $region23: #{tpu_custom_call.1} parent=11 // pred_region
          %p213 = scmp.lt.s32.totalorder %s28, 0
          %s214 = scalar_select %p213, %s28, 0
          %s215 = scalar_lea.vmem %s3, %s214
        $region24: #{tpu_custom_call.1} parent=11 // pred_fallthru
          _
      $region12: #{tpu_custom_call.1} parent=5 // pred_fallthru
        _
      %p216 = scmp.lt.s32.totalorder %s17, 2
      // Predicated region
      $region25: #{tpu_custom_call.1} parent=5 // pred_check
        %p217 = pneg %p216
      $region26: #{tpu_custom_call.1} parent=5 // pred_check_branch
        %219 = sbr.rel (%p217) target = $region28
      $region27: #{tpu_custom_call.1} parent=5 // pred_region
        // Predicated region
        $region29: #{tpu_custom_call.1} parent=27 // pred_check
          %p220 = pneg %p58
        $region30: #{tpu_custom_call.1} parent=27 // pred_check_branch
          %222 = sbr.rel (%p220) target = $region32
        $region31: #{tpu_custom_call.1} parent=27 // pred_region
          %s223 = sand.u32 %s48, 1
          %s224 = scalar_lea.sflag [#allocation4], %s223
          %s225 = sand.u32 %s48, 1
          %s226 = smul.addr %s225, 512
          %s227 = scalar_lea.vmem [#allocation3], %s226
          %s228 = smul.u32 32, %s24
          %s229 = smul.u32 4, %s26
          %s231 = ssub.s32 8192, 8192
          %232 = vsyncadd %s224, %s231
          %s233 = smul.addr %s228, 4
          %s234 = sadd.s32 %s229, %s233
          %s235 = smul.addr %s234, 64
          %s236 = scalar_lea.hbm %s0, %s235
          %s237 = sshll.u32 %s227, 4
          %s238 = int_to_ptr.vmem [resolvable:$true] %s237
          %243 = dma.hbm_to_vmem [thread:$0]  %s236, 8192, %s238, %s224, 256, 256, 16
        $region32: #{tpu_custom_call.1} parent=27 // pred_fallthru
          _
      $region28: #{tpu_custom_call.1} parent=5 // pred_fallthru
        _
      %p244 = scmp.le.s32.totalorder 1, %s17
      %p245 = scmp.lt.s32.totalorder %s17, 3
      %p246 = pnand %p244, %p245
      %p247 = pneg %p246
      // Predicated region
      $region33: #{tpu_custom_call.1} parent=5 // pred_check
        _
      $region34: #{tpu_custom_call.1} parent=5 // pred_check_branch
        %249 = sbr.rel (%p246) target = $region36
      $region35: #{tpu_custom_call.1} parent=5 // pred_region
        %s250 = ssub.s32 %s17, 1
        %s251 = sand.u32 %s51, 1
        %s252 = scalar_lea.sflag [#allocation4], %s251
        %s253 = sand.u32 %s51, 1
        %s254 = smul.addr %s253, 512
        %s255 = scalar_lea.vmem [#allocation3], %s254
        // Predicated region
        $region37: #{tpu_custom_call.1} parent=35 // pred_check
          %p256 = pneg %p64
        $region38: #{tpu_custom_call.1} parent=35 // pred_check_branch
          %258 = sbr.rel (%p256) target = $region40
        $region39: #{tpu_custom_call.1} parent=35 // pred_region
          %259 = dma.done %s252, 8192
        $region40: #{tpu_custom_call.1} parent=35 // pred_fallthru
          _
        // Predicated region
        $region41: #{tpu_custom_call.1} parent=35 // pred_check
          %p260 = pneg %p92
        $region42: #{tpu_custom_call.1} parent=35 // pred_check_branch
          %262 = sbr.rel (%p260) target = $region44
        $region43: #{tpu_custom_call.1} parent=35 // pred_region
          %263 = dma.done [#allocation7], 4096
        $region44: #{tpu_custom_call.1} parent=35 // pred_fallthru
          _
        %s264 = sand.u32 %s51, 1
        %s265 = scalar_lea.sflag [#allocation4], %s264
        %s266 = sand.u32 %s51, 1
        %s267 = smul.addr %s266, 512
        %s268 = scalar_lea.vmem [#allocation3], %s267
        %p269 = pneg %p64
        %p270 = pneg %p61
        %p271 = pneg %p92
        %p272 = pneg %p89
        %p273 = scmp.lt.s32.totalorder %s28, 0
        %s274 = scalar_select %p273, %s28, 0
        %s275 = scalar_lea.vmem %s2, %s274
        %p276 = pneg %p118
        %p277 = pneg %p115
        %p278 = scmp.lt.s32.totalorder %s28, 0
        %s279 = scalar_select %p278, %s28, 0
        %s280 = scalar_lea.vmem %s3, %s279
        %p281 = pneg %p144
        %p282 = pneg %p141
        %p283 = pneg %p172
        %p284 = pneg %p169
        %s285 = sand.u32 %s159, 1
        %s286 = scalar_lea.sflag [#allocation5], %s285
        %s287 = sand.u32 %s159, 1
        %s288 = smul.addr %s287, 128
        %s289 = scalar_lea.vmem [#allocation8], %s288
        %s290 = smul.u32 32, %s27
        %s291 = smul.u32 4, %s29
        %s292 = smul.u32 64, %s29
        %p293 = scmp.lt.s32.totalorder %s28, 0
        %s294 = scalar_select %p293, %s28, 0
        %s295 = scalar_lea.vmem %s2, %s294
        %p296 = scmp.lt.s32.totalorder %s28, 0
        %s297 = scalar_select %p296, %s28, 0
        %s298 = scalar_lea.vmem %s3, %s297
        %s299 = smul.u32 32, %s27
        %p301 = scmp.eq.s32.totalorder %s29, 0
        // Predicated region
        $region45: #{tpu_custom_call.1} parent=35 // pred_check
          %p302 = pneg %p301
        $region46: #{tpu_custom_call.1} parent=35 // pred_check_branch
          %304 = sbr.rel (%p302) target = $region48
        $region47: #{tpu_custom_call.1} parent=35 // pred_region
          %305 = vst [vmem:[#allocation2] sm:$0xff] 0.0
          %306 = vst [vmem:[#allocation2 + $0x8] sm:$0xff] 0.0
          %307 = vst [vmem:[#allocation2 + $0x10] sm:$0xff] 0.0
          %308 = vst [vmem:[#allocation2 + $0x18] sm:$0xff] 0.0
          %309 = vst [vmem:[#allocation2 + $0x20] sm:$0xff] 0.0
          %310 = vst [vmem:[#allocation2 + $0x28] sm:$0xff] 0.0
          %311 = vst [vmem:[#allocation2 + $0x30] sm:$0xff] 0.0
          %312 = vst [vmem:[#allocation2 + $0x38] sm:$0xff] 0.0
          %313 = vst [vmem:[#allocation2 + $0x40] sm:$0xff] 0.0
          %314 = vst [vmem:[#allocation2 + $0x48] sm:$0xff] 0.0
          %315 = vst [vmem:[#allocation2 + $0x50] sm:$0xff] 0.0
          %316 = vst [vmem:[#allocation2 + $0x58] sm:$0xff] 0.0
          %317 = vst [vmem:[#allocation2 + $0x60] sm:$0xff] 0.0
          %318 = vst [vmem:[#allocation2 + $0x68] sm:$0xff] 0.0
          %319 = vst [vmem:[#allocation2 + $0x70] sm:$0xff] 0.0
          %320 = vst [vmem:[#allocation2 + $0x78] sm:$0xff] 0.0
          %321 = vst [vmem:[#allocation2 + $0x80] sm:$0xff] 0.0
          %322 = vst [vmem:[#allocation2 + $0x88] sm:$0xff] 0.0
          %323 = vst [vmem:[#allocation2 + $0x90] sm:$0xff] 0.0
          %324 = vst [vmem:[#allocation2 + $0x98] sm:$0xff] 0.0
          %325 = vst [vmem:[#allocation2 + $0xa0] sm:$0xff] 0.0
          %326 = vst [vmem:[#allocation2 + $0xa8] sm:$0xff] 0.0
          %327 = vst [vmem:[#allocation2 + $0xb0] sm:$0xff] 0.0
          %328 = vst [vmem:[#allocation2 + $0xb8] sm:$0xff] 0.0
          %329 = vst [vmem:[#allocation2 + $0xc0] sm:$0xff] 0.0
          %330 = vst [vmem:[#allocation2 + $0xc8] sm:$0xff] 0.0
          %331 = vst [vmem:[#allocation2 + $0xd0] sm:$0xff] 0.0
          %332 = vst [vmem:[#allocation2 + $0xd8] sm:$0xff] 0.0
          %333 = vst [vmem:[#allocation2 + $0xe0] sm:$0xff] 0.0
          %334 = vst [vmem:[#allocation2 + $0xe8] sm:$0xff] 0.0
          %335 = vst [vmem:[#allocation2 + $0xf0] sm:$0xff] 0.0
          %336 = vst [vmem:[#allocation2 + $0xf8] sm:$0xff] 0.0
        $region48: #{tpu_custom_call.1} parent=35 // pred_fallthru
          _
        %v337 = vld [vmem:[#allocation2] sm:$0xff]
        %v338 = vld [vmem:[#allocation2 + $0x8] sm:$0xff]
        %v339 = vld [vmem:[#allocation2 + $0x10] sm:$0xff]
        %v340 = vld [vmem:[#allocation2 + $0x18] sm:$0xff]
        %v341 = vld [vmem:[#allocation2 + $0x20] sm:$0xff]
        %v342 = vld [vmem:[#allocation2 + $0x28] sm:$0xff]
        %v343 = vld [vmem:[#allocation2 + $0x30] sm:$0xff]
        %v344 = vld [vmem:[#allocation2 + $0x38] sm:$0xff]
        %v345 = vld [vmem:[#allocation2 + $0x40] sm:$0xff]
        %v346 = vld [vmem:[#allocation2 + $0x48] sm:$0xff]
        %v347 = vld [vmem:[#allocation2 + $0x50] sm:$0xff]
        %v348 = vld [vmem:[#allocation2 + $0x58] sm:$0xff]
        %v349 = vld [vmem:[#allocation2 + $0x60] sm:$0xff]
        %v350 = vld [vmem:[#allocation2 + $0x68] sm:$0xff]
        %v351 = vld [vmem:[#allocation2 + $0x70] sm:$0xff]
        %v352 = vld [vmem:[#allocation2 + $0x78] sm:$0xff]
        %v353 = vld [vmem:[#allocation2 + $0x80] sm:$0xff]
        %v354 = vld [vmem:[#allocation2 + $0x88] sm:$0xff]
        %v355 = vld [vmem:[#allocation2 + $0x90] sm:$0xff]
        %v356 = vld [vmem:[#allocation2 + $0x98] sm:$0xff]
        %v357 = vld [vmem:[#allocation2 + $0xa0] sm:$0xff]
        %v358 = vld [vmem:[#allocation2 + $0xa8] sm:$0xff]
        %v359 = vld [vmem:[#allocation2 + $0xb0] sm:$0xff]
        %v360 = vld [vmem:[#allocation2 + $0xb8] sm:$0xff]
        %v361 = vld [vmem:[#allocation2 + $0xc0] sm:$0xff]
        %v362 = vld [vmem:[#allocation2 + $0xc8] sm:$0xff]
        %v363 = vld [vmem:[#allocation2 + $0xd0] sm:$0xff]
        %v364 = vld [vmem:[#allocation2 + $0xd8] sm:$0xff]
        %v365 = vld [vmem:[#allocation2 + $0xe0] sm:$0xff]
        %v366 = vld [vmem:[#allocation2 + $0xe8] sm:$0xff]
        %v367 = vld [vmem:[#allocation2 + $0xf0] sm:$0xff]
        %v368 = vld [vmem:[#allocation2 + $0xf8] sm:$0xff]
        %v369 = vld [vmem:[%s255] sm:$0xff]
        %v370 = vld [vmem:[%s255 + $0x8] sm:$0xff]
        %v371 = vld [vmem:[%s255 + $0x10] sm:$0xff]
        %v372 = vld [vmem:[%s255 + $0x18] sm:$0xff]
        %v373 = vld [vmem:[%s255 + $0x20] sm:$0xff]
        %v374 = vld [vmem:[%s255 + $0x28] sm:$0xff]
        %v375 = vld [vmem:[%s255 + $0x30] sm:$0xff]
        %v376 = vld [vmem:[%s255 + $0x38] sm:$0xff]
        %v377 = vld [vmem:[%s255 + $0x40] sm:$0xff]
        %v378 = vld [vmem:[%s255 + $0x48] sm:$0xff]
        %v379 = vld [vmem:[%s255 + $0x50] sm:$0xff]
        %v380 = vld [vmem:[%s255 + $0x58] sm:$0xff]
        %v381 = vld [vmem:[%s255 + $0x60] sm:$0xff]
        %v382 = vld [vmem:[%s255 + $0x68] sm:$0xff]
        %v383 = vld [vmem:[%s255 + $0x70] sm:$0xff]
        %v384 = vld [vmem:[%s255 + $0x78] sm:$0xff]
        %v385 = vld [vmem:[%s255 + $0x80] sm:$0xff]
        %v386 = vld [vmem:[%s255 + $0x88] sm:$0xff]
        %v387 = vld [vmem:[%s255 + $0x90] sm:$0xff]
        %v388 = vld [vmem:[%s255 + $0x98] sm:$0xff]
        %v389 = vld [vmem:[%s255 + $0xa0] sm:$0xff]
        %v390 = vld [vmem:[%s255 + $0xa8] sm:$0xff]
        %v391 = vld [vmem:[%s255 + $0xb0] sm:$0xff]
        %v392 = vld [vmem:[%s255 + $0xb8] sm:$0xff]
        %v393 = vld [vmem:[%s255 + $0xc0] sm:$0xff]
        %v394 = vld [vmem:[%s255 + $0xc8] sm:$0xff]
        %v395 = vld [vmem:[%s255 + $0xd0] sm:$0xff]
        %v396 = vld [vmem:[%s255 + $0xd8] sm:$0xff]
        %v397 = vld [vmem:[%s255 + $0xe0] sm:$0xff]
        %v398 = vld [vmem:[%s255 + $0xe8] sm:$0xff]
        %v399 = vld [vmem:[%s255 + $0xf0] sm:$0xff]
        %v400 = vld [vmem:[%s255 + $0xf8] sm:$0xff]
        %v401 = vld [vmem:[%s255 + $0x100] sm:$0xff]
        %v402 = vld [vmem:[%s255 + $0x108] sm:$0xff]
        %v403 = vld [vmem:[%s255 + $0x110] sm:$0xff]
        %v404 = vld [vmem:[%s255 + $0x118] sm:$0xff]
        %v405 = vld [vmem:[%s255 + $0x120] sm:$0xff]
        %v406 = vld [vmem:[%s255 + $0x128] sm:$0xff]
        %v407 = vld [vmem:[%s255 + $0x130] sm:$0xff]
        %v408 = vld [vmem:[%s255 + $0x138] sm:$0xff]
        %v409 = vld [vmem:[%s255 + $0x140] sm:$0xff]
        %v410 = vld [vmem:[%s255 + $0x148] sm:$0xff]
        %v411 = vld [vmem:[%s255 + $0x150] sm:$0xff]
        %v412 = vld [vmem:[%s255 + $0x158] sm:$0xff]
        %v413 = vld [vmem:[%s255 + $0x160] sm:$0xff]
        %v414 = vld [vmem:[%s255 + $0x168] sm:$0xff]
        %v415 = vld [vmem:[%s255 + $0x170] sm:$0xff]
        %v416 = vld [vmem:[%s255 + $0x178] sm:$0xff]
        %v417 = vld [vmem:[%s255 + $0x180] sm:$0xff]
        %v418 = vld [vmem:[%s255 + $0x188] sm:$0xff]
        %v419 = vld [vmem:[%s255 + $0x190] sm:$0xff]
        %v420 = vld [vmem:[%s255 + $0x198] sm:$0xff]
        %v421 = vld [vmem:[%s255 + $0x1a0] sm:$0xff]
        %v422 = vld [vmem:[%s255 + $0x1a8] sm:$0xff]
        %v423 = vld [vmem:[%s255 + $0x1b0] sm:$0xff]
        %v424 = vld [vmem:[%s255 + $0x1b8] sm:$0xff]
        %v425 = vld [vmem:[%s255 + $0x1c0] sm:$0xff]
        %v426 = vld [vmem:[%s255 + $0x1c8] sm:$0xff]
        %v427 = vld [vmem:[%s255 + $0x1d0] sm:$0xff]
        %v428 = vld [vmem:[%s255 + $0x1d8] sm:$0xff]
        %v429 = vld [vmem:[%s255 + $0x1e0] sm:$0xff]
        %v430 = vld [vmem:[%s255 + $0x1e8] sm:$0xff]
        %v431 = vld [vmem:[%s255 + $0x1f0] sm:$0xff]
        %v432 = vld [vmem:[%s255 + $0x1f8] sm:$0xff]
        %v433 = vld [vmem:[#allocation6] sm:$0xf]
        %v434 = vld [vmem:[#allocation6 + $0x4] sm:$0xf]
        %v435 = vld [vmem:[#allocation6 + $0x8] sm:$0xf]
        %v436 = vld [vmem:[#allocation6 + $0xc] sm:$0xf]
        %v437 = vld [vmem:[#allocation6 + $0x10] sm:$0xf]
        %v438 = vld [vmem:[#allocation6 + $0x14] sm:$0xf]
        %v439 = vld [vmem:[#allocation6 + $0x18] sm:$0xf]
        %v440 = vld [vmem:[#allocation6 + $0x1c] sm:$0xf]
        %v441 = vld [vmem:[#allocation6 + $0x20] sm:$0xf]
        %v442 = vld [vmem:[#allocation6 + $0x24] sm:$0xf]
        %v443 = vld [vmem:[#allocation6 + $0x28] sm:$0xf]
        %v444 = vld [vmem:[#allocation6 + $0x2c] sm:$0xf]
        %v445 = vld [vmem:[#allocation6 + $0x30] sm:$0xf]
        %v446 = vld [vmem:[#allocation6 + $0x34] sm:$0xf]
        %v447 = vld [vmem:[#allocation6 + $0x38] sm:$0xf]
        %v448 = vld [vmem:[#allocation6 + $0x3c] sm:$0xf]
        %v449 = vld [vmem:[#allocation6 + $0x40] sm:$0xf]
        %v450 = vld [vmem:[#allocation6 + $0x44] sm:$0xf]
        %v451 = vld [vmem:[#allocation6 + $0x48] sm:$0xf]
        %v452 = vld [vmem:[#allocation6 + $0x4c] sm:$0xf]
        %v453 = vld [vmem:[#allocation6 + $0x50] sm:$0xf]
        %v454 = vld [vmem:[#allocation6 + $0x54] sm:$0xf]
        %v455 = vld [vmem:[#allocation6 + $0x58] sm:$0xf]
        %v456 = vld [vmem:[#allocation6 + $0x5c] sm:$0xf]
        %v457 = vld [vmem:[#allocation6 + $0x60] sm:$0xf]
        %v458 = vld [vmem:[#allocation6 + $0x64] sm:$0xf]
        %v459 = vld [vmem:[#allocation6 + $0x68] sm:$0xf]
        %v460 = vld [vmem:[#allocation6 + $0x6c] sm:$0xf]
        %v461 = vld [vmem:[#allocation6 + $0x70] sm:$0xf]
        %v462 = vld [vmem:[#allocation6 + $0x74] sm:$0xf]
        %v463 = vld [vmem:[#allocation6 + $0x78] sm:$0xf]
        %v464 = vld [vmem:[#allocation6 + $0x7c] sm:$0xf]
        %v465 = vld [vmem:[#allocation6 + $0x80] sm:$0xf]
        %v466 = vld [vmem:[#allocation6 + $0x84] sm:$0xf]
        %v467 = vld [vmem:[#allocation6 + $0x88] sm:$0xf]
        %v468 = vld [vmem:[#allocation6 + $0x8c] sm:$0xf]
        %v469 = vld [vmem:[#allocation6 + $0x90] sm:$0xf]
        %v470 = vld [vmem:[#allocation6 + $0x94] sm:$0xf]
        %v471 = vld [vmem:[#allocation6 + $0x98] sm:$0xf]
        %v472 = vld [vmem:[#allocation6 + $0x9c] sm:$0xf]
        %v473 = vld [vmem:[#allocation6 + $0xa0] sm:$0xf]
        %v474 = vld [vmem:[#allocation6 + $0xa4] sm:$0xf]
        %v475 = vld [vmem:[#allocation6 + $0xa8] sm:$0xf]
        %v476 = vld [vmem:[#allocation6 + $0xac] sm:$0xf]
        %v477 = vld [vmem:[#allocation6 + $0xb0] sm:$0xf]
        %v478 = vld [vmem:[#allocation6 + $0xb4] sm:$0xf]
        %v479 = vld [vmem:[#allocation6 + $0xb8] sm:$0xf]
        %v480 = vld [vmem:[#allocation6 + $0xbc] sm:$0xf]
        %v481 = vld [vmem:[#allocation6 + $0xc0] sm:$0xf]
        %v482 = vld [vmem:[#allocation6 + $0xc4] sm:$0xf]
        %v483 = vld [vmem:[#allocation6 + $0xc8] sm:$0xf]
        %v484 = vld [vmem:[#allocation6 + $0xcc] sm:$0xf]
        %v485 = vld [vmem:[#allocation6 + $0xd0] sm:$0xf]
        %v486 = vld [vmem:[#allocation6 + $0xd4] sm:$0xf]
        %v487 = vld [vmem:[#allocation6 + $0xd8] sm:$0xf]
        %v488 = vld [vmem:[#allocation6 + $0xdc] sm:$0xf]
        %v489 = vld [vmem:[#allocation6 + $0xe0] sm:$0xf]
        %v490 = vld [vmem:[#allocation6 + $0xe4] sm:$0xf]
        %v491 = vld [vmem:[#allocation6 + $0xe8] sm:$0xf]
        %v492 = vld [vmem:[#allocation6 + $0xec] sm:$0xf]
        %v493 = vld [vmem:[#allocation6 + $0xf0] sm:$0xf]
        %v494 = vld [vmem:[#allocation6 + $0xf4] sm:$0xf]
        %v495 = vld [vmem:[#allocation6 + $0xf8] sm:$0xf]
        %v496 = vld [vmem:[#allocation6 + $0xfc] sm:$0xf]
        %v561 = vunpack.c.l.b16 %v369
        %v562 = vunpack.c.h.b16 %v369
        %v563 = vunpack.c.l.b16 %v370
        %v564 = vunpack.c.h.b16 %v370
        %v565 = vunpack.c.l.b16 %v371
        %v566 = vunpack.c.h.b16 %v371
        %v567 = vunpack.c.l.b16 %v372
        %v568 = vunpack.c.h.b16 %v372
        %v569 = vunpack.c.l.b16 %v373
        %v570 = vunpack.c.h.b16 %v373
        %v571 = vunpack.c.l.b16 %v374
        %v572 = vunpack.c.h.b16 %v374
        %v573 = vunpack.c.l.b16 %v375
        %v574 = vunpack.c.h.b16 %v375
        %v575 = vunpack.c.l.b16 %v376
        %v576 = vunpack.c.h.b16 %v376
        %v577 = vunpack.c.l.b16 %v377
        %v578 = vunpack.c.h.b16 %v377
        %v579 = vunpack.c.l.b16 %v378
        %v580 = vunpack.c.h.b16 %v378
        %v581 = vunpack.c.l.b16 %v379
        %v582 = vunpack.c.h.b16 %v379
        %v583 = vunpack.c.l.b16 %v380
        %v584 = vunpack.c.h.b16 %v380
        %v585 = vunpack.c.l.b16 %v381
        %v586 = vunpack.c.h.b16 %v381
        %v587 = vunpack.c.l.b16 %v382
        %v588 = vunpack.c.h.b16 %v382
        %v589 = vunpack.c.l.b16 %v383
        %v590 = vunpack.c.h.b16 %v383
        %v591 = vunpack.c.l.b16 %v384
        %v592 = vunpack.c.h.b16 %v384
        %v593 = vunpack.c.l.b16 %v385
        %v594 = vunpack.c.h.b16 %v385
        %v595 = vunpack.c.l.b16 %v386
        %v596 = vunpack.c.h.b16 %v386
        %v597 = vunpack.c.l.b16 %v387
        %v598 = vunpack.c.h.b16 %v387
        %v599 = vunpack.c.l.b16 %v388
        %v600 = vunpack.c.h.b16 %v388
        %v601 = vunpack.c.l.b16 %v389
        %v602 = vunpack.c.h.b16 %v389
        %v603 = vunpack.c.l.b16 %v390
        %v604 = vunpack.c.h.b16 %v390
        %v605 = vunpack.c.l.b16 %v391
        %v606 = vunpack.c.h.b16 %v391
        %v607 = vunpack.c.l.b16 %v392
        %v608 = vunpack.c.h.b16 %v392
        %v609 = vunpack.c.l.b16 %v393
        %v610 = vunpack.c.h.b16 %v393
        %v611 = vunpack.c.l.b16 %v394
        %v612 = vunpack.c.h.b16 %v394
        %v613 = vunpack.c.l.b16 %v395
        %v614 = vunpack.c.h.b16 %v395
        %v615 = vunpack.c.l.b16 %v396
        %v616 = vunpack.c.h.b16 %v396
        %v617 = vunpack.c.l.b16 %v397
        %v618 = vunpack.c.h.b16 %v397
        %v619 = vunpack.c.l.b16 %v398
        %v620 = vunpack.c.h.b16 %v398
        %v621 = vunpack.c.l.b16 %v399
        %v622 = vunpack.c.h.b16 %v399
        %v623 = vunpack.c.l.b16 %v400
        %v624 = vunpack.c.h.b16 %v400
        %v625 = vunpack.c.l.b16 %v401
        %v626 = vunpack.c.h.b16 %v401
        %v627 = vunpack.c.l.b16 %v402
        %v628 = vunpack.c.h.b16 %v402
        %v629 = vunpack.c.l.b16 %v403
        %v630 = vunpack.c.h.b16 %v403
        %v631 = vunpack.c.l.b16 %v404
        %v632 = vunpack.c.h.b16 %v404
        %v633 = vunpack.c.l.b16 %v405
        %v634 = vunpack.c.h.b16 %v405
        %v635 = vunpack.c.l.b16 %v406
        %v636 = vunpack.c.h.b16 %v406
        %v637 = vunpack.c.l.b16 %v407
        %v638 = vunpack.c.h.b16 %v407
        %v639 = vunpack.c.l.b16 %v408
        %v640 = vunpack.c.h.b16 %v408
        %v641 = vunpack.c.l.b16 %v409
        %v642 = vunpack.c.h.b16 %v409
        %v643 = vunpack.c.l.b16 %v410
        %v644 = vunpack.c.h.b16 %v410
        %v645 = vunpack.c.l.b16 %v411
        %v646 = vunpack.c.h.b16 %v411
        %v647 = vunpack.c.l.b16 %v412
        %v648 = vunpack.c.h.b16 %v412
        %v649 = vunpack.c.l.b16 %v413
        %v650 = vunpack.c.h.b16 %v413
        %v651 = vunpack.c.l.b16 %v414
        %v652 = vunpack.c.h.b16 %v414
        %v653 = vunpack.c.l.b16 %v415
        %v654 = vunpack.c.h.b16 %v415
        %v655 = vunpack.c.l.b16 %v416
        %v656 = vunpack.c.h.b16 %v416
        %v657 = vunpack.c.l.b16 %v417
        %v658 = vunpack.c.h.b16 %v417
        %v659 = vunpack.c.l.b16 %v418
        %v660 = vunpack.c.h.b16 %v418
        %v661 = vunpack.c.l.b16 %v419
        %v662 = vunpack.c.h.b16 %v419
        %v663 = vunpack.c.l.b16 %v420
        %v664 = vunpack.c.h.b16 %v420
        %v665 = vunpack.c.l.b16 %v421
        %v666 = vunpack.c.h.b16 %v421
        %v667 = vunpack.c.l.b16 %v422
        %v668 = vunpack.c.h.b16 %v422
        %v669 = vunpack.c.l.b16 %v423
        %v670 = vunpack.c.h.b16 %v423
        %v671 = vunpack.c.l.b16 %v424
        %v672 = vunpack.c.h.b16 %v424
        %v673 = vunpack.c.l.b16 %v425
        %v674 = vunpack.c.h.b16 %v425
        %v675 = vunpack.c.l.b16 %v426
        %v676 = vunpack.c.h.b16 %v426
        %v677 = vunpack.c.l.b16 %v427
        %v678 = vunpack.c.h.b16 %v427
        %v679 = vunpack.c.l.b16 %v428
        %v680 = vunpack.c.h.b16 %v428
        %v681 = vunpack.c.l.b16 %v429
        %v682 = vunpack.c.h.b16 %v429
        %v683 = vunpack.c.l.b16 %v430
        %v684 = vunpack.c.h.b16 %v430
        %v685 = vunpack.c.l.b16 %v431
        %v686 = vunpack.c.h.b16 %v431
        %v687 = vunpack.c.l.b16 %v432
        %v688 = vunpack.c.h.b16 %v432
        %v689 = vpack.c.b16 %v565, %v561
        %v690 = vpack.c.b16 %v566, %v562
        %v691 = vpack.c.b16 %v567, %v563
        %v692 = vpack.c.b16 %v568, %v564
        %v693 = vpack.c.b16 %v573, %v569
        %v694 = vpack.c.b16 %v574, %v570
        %v695 = vpack.c.b16 %v575, %v571
        %v696 = vpack.c.b16 %v576, %v572
        %v697 = vpack.c.b16 %v581, %v577
        %v698 = vpack.c.b16 %v582, %v578
        %v699 = vpack.c.b16 %v583, %v579
        %v700 = vpack.c.b16 %v584, %v580
        %v701 = vpack.c.b16 %v589, %v585
        %v702 = vpack.c.b16 %v590, %v586
        %v703 = vpack.c.b16 %v591, %v587
        %v704 = vpack.c.b16 %v592, %v588
        %v705 = vpack.c.b16 %v597, %v593
        %v706 = vpack.c.b16 %v598, %v594
        %v707 = vpack.c.b16 %v599, %v595
        %v708 = vpack.c.b16 %v600, %v596
        %v709 = vpack.c.b16 %v605, %v601
        %v710 = vpack.c.b16 %v606, %v602
        %v711 = vpack.c.b16 %v607, %v603
        %v712 = vpack.c.b16 %v608, %v604
        %v713 = vpack.c.b16 %v613, %v609
        %v714 = vpack.c.b16 %v614, %v610
        %v715 = vpack.c.b16 %v615, %v611
        %v716 = vpack.c.b16 %v616, %v612
        %v717 = vpack.c.b16 %v621, %v617
        %v718 = vpack.c.b16 %v622, %v618
        %v719 = vpack.c.b16 %v623, %v619
        %v720 = vpack.c.b16 %v624, %v620
        %v721 = vpack.c.b16 %v629, %v625
        %v722 = vpack.c.b16 %v630, %v626
        %v723 = vpack.c.b16 %v631, %v627
        %v724 = vpack.c.b16 %v632, %v628
        %v725 = vpack.c.b16 %v637, %v633
        %v726 = vpack.c.b16 %v638, %v634
        %v727 = vpack.c.b16 %v639, %v635
        %v728 = vpack.c.b16 %v640, %v636
        %v729 = vpack.c.b16 %v645, %v641
        %v730 = vpack.c.b16 %v646, %v642
        %v731 = vpack.c.b16 %v647, %v643
        %v732 = vpack.c.b16 %v648, %v644
        %v733 = vpack.c.b16 %v653, %v649
        %v734 = vpack.c.b16 %v654, %v650
        %v735 = vpack.c.b16 %v655, %v651
        %v736 = vpack.c.b16 %v656, %v652
        %v737 = vpack.c.b16 %v661, %v657
        %v738 = vpack.c.b16 %v662, %v658
        %v739 = vpack.c.b16 %v663, %v659
        %v740 = vpack.c.b16 %v664, %v660
        %v741 = vpack.c.b16 %v669, %v665
        %v742 = vpack.c.b16 %v670, %v666
        %v743 = vpack.c.b16 %v671, %v667
        %v744 = vpack.c.b16 %v672, %v668
        %v745 = vpack.c.b16 %v677, %v673
        %v746 = vpack.c.b16 %v678, %v674
        %v747 = vpack.c.b16 %v679, %v675
        %v748 = vpack.c.b16 %v680, %v676
        %v749 = vpack.c.b16 %v685, %v681
        %v750 = vpack.c.b16 %v686, %v682
        %v751 = vpack.c.b16 %v687, %v683
        %v752 = vpack.c.b16 %v688, %v684
        %v881 = vunpack.c.l.b16 %v433
        %v882 = vunpack.c.l.b16 %v434
        %v883 = vunpack.c.l.b16 %v435
        %v884 = vunpack.c.l.b16 %v436
        %v885 = vunpack.c.l.b16 %v437
        %v886 = vunpack.c.l.b16 %v438
        %v887 = vunpack.c.l.b16 %v439
        %v888 = vunpack.c.l.b16 %v440
        %v889 = vunpack.c.l.b16 %v441
        %v890 = vunpack.c.l.b16 %v442
        %v891 = vunpack.c.l.b16 %v443
        %v892 = vunpack.c.l.b16 %v444
        %v893 = vunpack.c.l.b16 %v445
        %v894 = vunpack.c.l.b16 %v446
        %v895 = vunpack.c.l.b16 %v447
        %v896 = vunpack.c.l.b16 %v448
        %v897 = vunpack.c.l.b16 %v449
        %v898 = vunpack.c.l.b16 %v450
        %v899 = vunpack.c.l.b16 %v451
        %v900 = vunpack.c.l.b16 %v452
        %v901 = vunpack.c.l.b16 %v453
        %v902 = vunpack.c.l.b16 %v454
        %v903 = vunpack.c.l.b16 %v455
        %v904 = vunpack.c.l.b16 %v456
        %v905 = vunpack.c.l.b16 %v457
        %v906 = vunpack.c.l.b16 %v458
        %v907 = vunpack.c.l.b16 %v459
        %v908 = vunpack.c.l.b16 %v460
        %v909 = vunpack.c.l.b16 %v461
        %v910 = vunpack.c.l.b16 %v462
        %v911 = vunpack.c.l.b16 %v463
        %v912 = vunpack.c.l.b16 %v464
        %v913 = vunpack.c.l.b16 %v465
        %v914 = vunpack.c.l.b16 %v466
        %v915 = vunpack.c.l.b16 %v467
        %v916 = vunpack.c.l.b16 %v468
        %v917 = vunpack.c.l.b16 %v469
        %v918 = vunpack.c.l.b16 %v470
        %v919 = vunpack.c.l.b16 %v471
        %v920 = vunpack.c.l.b16 %v472
        %v921 = vunpack.c.l.b16 %v473
        %v922 = vunpack.c.l.b16 %v474
        %v923 = vunpack.c.l.b16 %v475
        %v924 = vunpack.c.l.b16 %v476
        %v925 = vunpack.c.l.b16 %v477
        %v926 = vunpack.c.l.b16 %v478
        %v927 = vunpack.c.l.b16 %v479
        %v928 = vunpack.c.l.b16 %v480
        %v929 = vunpack.c.l.b16 %v481
        %v930 = vunpack.c.l.b16 %v482
        %v931 = vunpack.c.l.b16 %v483
        %v932 = vunpack.c.l.b16 %v484
        %v933 = vunpack.c.l.b16 %v485
        %v934 = vunpack.c.l.b16 %v486
        %v935 = vunpack.c.l.b16 %v487
        %v936 = vunpack.c.l.b16 %v488
        %v937 = vunpack.c.l.b16 %v489
        %v938 = vunpack.c.l.b16 %v490
        %v939 = vunpack.c.l.b16 %v491
        %v940 = vunpack.c.l.b16 %v492
        %v941 = vunpack.c.l.b16 %v493
        %v942 = vunpack.c.l.b16 %v494
        %v943 = vunpack.c.l.b16 %v495
        %v944 = vunpack.c.l.b16 %v496
        %v945 = vpack.c.b16 %v882, %v881
        %v946 = vpack.c.b16 %v884, %v883
        %v947 = vpack.c.b16 %v886, %v885
        %v948 = vpack.c.b16 %v888, %v887
        %v949 = vpack.c.b16 %v890, %v889
        %v950 = vpack.c.b16 %v892, %v891
        %v951 = vpack.c.b16 %v894, %v893
        %v952 = vpack.c.b16 %v896, %v895
        %v953 = vpack.c.b16 %v898, %v897
        %v954 = vpack.c.b16 %v900, %v899
        %v955 = vpack.c.b16 %v902, %v901
        %v956 = vpack.c.b16 %v904, %v903
        %v957 = vpack.c.b16 %v906, %v905
        %v958 = vpack.c.b16 %v908, %v907
        %v959 = vpack.c.b16 %v910, %v909
        %v960 = vpack.c.b16 %v912, %v911
        %v961 = vpack.c.b16 %v914, %v913
        %v962 = vpack.c.b16 %v916, %v915
        %v963 = vpack.c.b16 %v918, %v917
        %v964 = vpack.c.b16 %v920, %v919
        %v965 = vpack.c.b16 %v922, %v921
        %v966 = vpack.c.b16 %v924, %v923
        %v967 = vpack.c.b16 %v926, %v925
        %v968 = vpack.c.b16 %v928, %v927
        %v969 = vpack.c.b16 %v930, %v929
        %v970 = vpack.c.b16 %v932, %v931
        %v971 = vpack.c.b16 %v934, %v933
        %v972 = vpack.c.b16 %v936, %v935
        %v973 = vpack.c.b16 %v938, %v937
        %v974 = vpack.c.b16 %v940, %v939
        %v975 = vpack.c.b16 %v942, %v941
        %v976 = vpack.c.b16 %v944, %v943
        %1009 = vmatprep.subr.bf16.mxu0 0
        %1010 = vmatpush1.bf16.msra.mxu0 %v952
        %1011 = vmatprep.subr.bf16.mxu0 0
        %1012 = vmatpush1.bf16.msra.mxu0 %v951
        %1013 = vmatprep.subr.bf16.mxu0 0
        %1014 = vmatpush1.bf16.msra.mxu0 %v950
        %1015 = vmatprep.subr.bf16.mxu0 0
        %1016 = vmatpush1.bf16.msra.mxu0 %v949
        %1017 = vmatprep.subr.bf16.mxu0 0
        %1018 = vmatpush1.bf16.msra.mxu0 %v948
        %1019 = vmatprep.subr.bf16.mxu0 0
        %1020 = vmatpush1.bf16.msra.mxu0 %v947
        %1021 = vmatprep.subr.bf16.mxu0 0
        %1022 = vmatpush1.bf16.msra.mxu0 %v946
        %1023 = vmatprep.subr.bf16.mxu0 0
        %1024 = vmatpush1.bf16.msra.mxu0 %v945
        %1025 = vmatprep.subr.bf16.mxu0 0
        %1026 = vmatpush2.bf16.msra.mxu0 %v960
        %1027 = vmatprep.subr.bf16.mxu0 0
        %1028 = vmatpush2.bf16.msra.mxu0 %v959
        %1029 = vmatprep.subr.bf16.mxu0 0
        %1030 = vmatpush2.bf16.msra.mxu0 %v958
        %1031 = vmatprep.subr.bf16.mxu0 0
        %1032 = vmatpush2.bf16.msra.mxu0 %v957
        %1033 = vmatprep.subr.bf16.mxu0 0
        %1034 = vmatpush2.bf16.msra.mxu0 %v956
        %1035 = vmatprep.subr.bf16.mxu0 0
        %1036 = vmatpush2.bf16.msra.mxu0 %v955
        %1037 = vmatprep.subr.bf16.mxu0 0
        %1038 = vmatpush2.bf16.msra.mxu0 %v954
        %1039 = vmatprep.subr.bf16.mxu0 0
        %1040 = vmatpush2.bf16.msra.mxu0 %v953
        %1041 = vmatprep.mubr.bf16.mxu0 %v690
        %1042 = vmatmul.mubr.bf16.gmra.mxu0 %v689
        %v1043 = vpop.f32.mrf.mxu0
        %v1044 = vadd.f32 0.0, %v1043
        %v1045 = vpop.f32.mrf.mxu0
        %v1046 = vpop.f32.mrf.mxu0
        %v1047 = vadd.f32 0.0, %v1046
        %v1048 = vpop.f32.mrf.mxu0
        %1049 = vmatprep.mubr.bf16.mxu0 %v694
        %1050 = vmatmul.mubr.bf16.gmra.mxu0 %v693
        %v1051 = vpop.f32.mrf.mxu0
        %v1052 = vadd.f32 0.0, %v1051
        %v1053 = vpop.f32.mrf.mxu0
        %v1054 = vpop.f32.mrf.mxu0
        %v1055 = vadd.f32 0.0, %v1054
        %v1056 = vpop.f32.mrf.mxu0
        %1057 = vmatprep.mubr.bf16.mxu0 %v698
        %1058 = vmatmul.mubr.bf16.gmra.mxu0 %v697
        %v1059 = vpop.f32.mrf.mxu0
        %v1060 = vadd.f32 0.0, %v1059
        %v1061 = vpop.f32.mrf.mxu0
        %v1062 = vpop.f32.mrf.mxu0
        %v1063 = vadd.f32 0.0, %v1062
        %v1064 = vpop.f32.mrf.mxu0
        %1065 = vmatprep.mubr.bf16.mxu0 %v702
        %1066 = vmatmul.mubr.bf16.gmra.mxu0 %v701
        %v1067 = vpop.f32.mrf.mxu0
        %v1068 = vadd.f32 0.0, %v1067
        %v1069 = vpop.f32.mrf.mxu0
        %v1070 = vpop.f32.mrf.mxu0
        %v1071 = vadd.f32 0.0, %v1070
        %v1072 = vpop.f32.mrf.mxu0
        %1073 = vmatprep.mubr.bf16.mxu0 %v706
        %1074 = vmatmul.mubr.bf16.gmra.mxu0 %v705
        %v1075 = vpop.f32.mrf.mxu0
        %v1076 = vadd.f32 0.0, %v1075
        %v1077 = vpop.f32.mrf.mxu0
        %v1078 = vpop.f32.mrf.mxu0
        %v1079 = vadd.f32 0.0, %v1078
        %v1080 = vpop.f32.mrf.mxu0
        %1081 = vmatprep.mubr.bf16.mxu0 %v710
        %1082 = vmatmul.mubr.bf16.gmra.mxu0 %v709
        %v1083 = vpop.f32.mrf.mxu0
        %v1084 = vadd.f32 0.0, %v1083
        %v1085 = vpop.f32.mrf.mxu0
        %v1086 = vpop.f32.mrf.mxu0
        %v1087 = vadd.f32 0.0, %v1086
        %v1088 = vpop.f32.mrf.mxu0
        %1089 = vmatprep.mubr.bf16.mxu0 %v714
        %1090 = vmatmul.mubr.bf16.gmra.mxu0 %v713
        %v1091 = vpop.f32.mrf.mxu0
        %v1092 = vadd.f32 0.0, %v1091
        %v1093 = vpop.f32.mrf.mxu0
        %v1094 = vpop.f32.mrf.mxu0
        %v1095 = vadd.f32 0.0, %v1094
        %v1096 = vpop.f32.mrf.mxu0
        %1097 = vmatprep.mubr.bf16.mxu0 %v718
        %1098 = vmatmul.mubr.bf16.gmra.mxu0 %v717
        %v1099 = vpop.f32.mrf.mxu0
        %v1100 = vadd.f32 0.0, %v1099
        %v1101 = vpop.f32.mrf.mxu0
        %v1102 = vpop.f32.mrf.mxu0
        %v1103 = vadd.f32 0.0, %v1102
        %v1104 = vpop.f32.mrf.mxu0
        %1105 = vmatprep.mubr.bf16.mxu0 %v722
        %1106 = vmatmul.mubr.bf16.gmra.mxu0 %v721
        %v1107 = vpop.f32.mrf.mxu0
        %v1108 = vadd.f32 0.0, %v1107
        %v1109 = vpop.f32.mrf.mxu0
        %v1110 = vpop.f32.mrf.mxu0
        %v1111 = vadd.f32 0.0, %v1110
        %v1112 = vpop.f32.mrf.mxu0
        %1113 = vmatprep.mubr.bf16.mxu0 %v726
        %1114 = vmatmul.mubr.bf16.gmra.mxu0 %v725
        %v1115 = vpop.f32.mrf.mxu0
        %v1116 = vadd.f32 0.0, %v1115
        %v1117 = vpop.f32.mrf.mxu0
        %v1118 = vpop.f32.mrf.mxu0
        %v1119 = vadd.f32 0.0, %v1118
        %v1120 = vpop.f32.mrf.mxu0
        %1121 = vmatprep.mubr.bf16.mxu0 %v730
        %1122 = vmatmul.mubr.bf16.gmra.mxu0 %v729
        %v1123 = vpop.f32.mrf.mxu0
        %v1124 = vadd.f32 0.0, %v1123
        %v1125 = vpop.f32.mrf.mxu0
        %v1126 = vpop.f32.mrf.mxu0
        %v1127 = vadd.f32 0.0, %v1126
        %v1128 = vpop.f32.mrf.mxu0
        %1129 = vmatprep.mubr.bf16.mxu0 %v734
        %1130 = vmatmul.mubr.bf16.gmra.mxu0 %v733
        %v1131 = vpop.f32.mrf.mxu0
        %v1132 = vadd.f32 0.0, %v1131
        %v1133 = vpop.f32.mrf.mxu0
        %v1134 = vpop.f32.mrf.mxu0
        %v1135 = vadd.f32 0.0, %v1134
        %v1136 = vpop.f32.mrf.mxu0
        %1137 = vmatprep.mubr.bf16.mxu0 %v738
        %1138 = vmatmul.mubr.bf16.gmra.mxu0 %v737
        %v1139 = vpop.f32.mrf.mxu0
        %v1140 = vadd.f32 0.0, %v1139
        %v1141 = vpop.f32.mrf.mxu0
        %v1142 = vpop.f32.mrf.mxu0
        %v1143 = vadd.f32 0.0, %v1142
        %v1144 = vpop.f32.mrf.mxu0
        %1145 = vmatprep.mubr.bf16.mxu0 %v742
        %1146 = vmatmul.mubr.bf16.gmra.mxu0 %v741
        %v1147 = vpop.f32.mrf.mxu0
        %v1148 = vadd.f32 0.0, %v1147
        %v1149 = vpop.f32.mrf.mxu0
        %v1150 = vpop.f32.mrf.mxu0
        %v1151 = vadd.f32 0.0, %v1150
        %v1152 = vpop.f32.mrf.mxu0
        %1153 = vmatprep.mubr.bf16.mxu0 %v746
        %1154 = vmatmul.mubr.bf16.gmra.mxu0 %v745
        %v1155 = vpop.f32.mrf.mxu0
        %v1156 = vadd.f32 0.0, %v1155
        %v1157 = vpop.f32.mrf.mxu0
        %v1158 = vpop.f32.mrf.mxu0
        %v1159 = vadd.f32 0.0, %v1158
        %v1160 = vpop.f32.mrf.mxu0
        %1161 = vmatprep.mubr.bf16.mxu0 %v750
        %1162 = vmatmul.mubr.bf16.gmra.mxu0 %v749
        %v1163 = vpop.f32.mrf.mxu0
        %v1164 = vadd.f32 0.0, %v1163
        %v1165 = vpop.f32.mrf.mxu0
        %v1166 = vpop.f32.mrf.mxu0
        %v1167 = vadd.f32 0.0, %v1166
        %v1168 = vpop.f32.mrf.mxu0
        %1169 = vdwg.mxu0
        %1170 = vmatprep.subr.bf16.mxu0 0
        %1171 = vmatpush1.bf16.msra.mxu0 %v968
        %1172 = vmatprep.subr.bf16.mxu0 0
        %1173 = vmatpush1.bf16.msra.mxu0 %v967
        %1174 = vmatprep.subr.bf16.mxu0 0
        %1175 = vmatpush1.bf16.msra.mxu0 %v966
        %1176 = vmatprep.subr.bf16.mxu0 0
        %1177 = vmatpush1.bf16.msra.mxu0 %v965
        %1178 = vmatprep.subr.bf16.mxu0 0
        %1179 = vmatpush1.bf16.msra.mxu0 %v964
        %1180 = vmatprep.subr.bf16.mxu0 0
        %1181 = vmatpush1.bf16.msra.mxu0 %v963
        %1182 = vmatprep.subr.bf16.mxu0 0
        %1183 = vmatpush1.bf16.msra.mxu0 %v962
        %1184 = vmatprep.subr.bf16.mxu0 0
        %1185 = vmatpush1.bf16.msra.mxu0 %v961
        %1186 = vmatprep.subr.bf16.mxu0 0
        %1187 = vmatpush2.bf16.msra.mxu0 %v976
        %1188 = vmatprep.subr.bf16.mxu0 0
        %1189 = vmatpush2.bf16.msra.mxu0 %v975
        %1190 = vmatprep.subr.bf16.mxu0 0
        %1191 = vmatpush2.bf16.msra.mxu0 %v974
        %1192 = vmatprep.subr.bf16.mxu0 0
        %1193 = vmatpush2.bf16.msra.mxu0 %v973
        %1194 = vmatprep.subr.bf16.mxu0 0
        %1195 = vmatpush2.bf16.msra.mxu0 %v972
        %1196 = vmatprep.subr.bf16.mxu0 0
        %1197 = vmatpush2.bf16.msra.mxu0 %v971
        %1198 = vmatprep.subr.bf16.mxu0 0
        %1199 = vmatpush2.bf16.msra.mxu0 %v970
        %1200 = vmatprep.subr.bf16.mxu0 0
        %1201 = vmatpush2.bf16.msra.mxu0 %v969
        %1202 = vmatprep.mubr.bf16.mxu0 %v692
        %1203 = vmatmul.mubr.bf16.gmra.mxu0 %v691
        %v1204 = vpop.f32.mrf.mxu0
        %v1205 = vadd.f32 %v1044, %v1204
        %v1206 = vpop.f32.mrf.mxu0
        %v1207 = vpop.f32.mrf.mxu0
        %v1208 = vadd.f32 %v1047, %v1207
        %v1209 = vpop.f32.mrf.mxu0
        %1210 = vmatprep.mubr.bf16.mxu0 %v696
        %1211 = vmatmul.mubr.bf16.gmra.mxu0 %v695
        %v1212 = vpop.f32.mrf.mxu0
        %v1213 = vadd.f32 %v1052, %v1212
        %v1214 = vpop.f32.mrf.mxu0
        %v1215 = vpop.f32.mrf.mxu0
        %v1216 = vadd.f32 %v1055, %v1215
        %v1217 = vpop.f32.mrf.mxu0
        %1218 = vmatprep.mubr.bf16.mxu0 %v700
        %1219 = vmatmul.mubr.bf16.gmra.mxu0 %v699
        %v1220 = vpop.f32.mrf.mxu0
        %v1221 = vadd.f32 %v1060, %v1220
        %v1222 = vpop.f32.mrf.mxu0
        %v1223 = vpop.f32.mrf.mxu0
        %v1224 = vadd.f32 %v1063, %v1223
        %v1225 = vpop.f32.mrf.mxu0
        %1226 = vmatprep.mubr.bf16.mxu0 %v704
        %1227 = vmatmul.mubr.bf16.gmra.mxu0 %v703
        %v1228 = vpop.f32.mrf.mxu0
        %v1229 = vadd.f32 %v1068, %v1228
        %v1230 = vpop.f32.mrf.mxu0
        %v1231 = vpop.f32.mrf.mxu0
        %v1232 = vadd.f32 %v1071, %v1231
        %v1233 = vpop.f32.mrf.mxu0
        %1234 = vmatprep.mubr.bf16.mxu0 %v708
        %1235 = vmatmul.mubr.bf16.gmra.mxu0 %v707
        %v1236 = vpop.f32.mrf.mxu0
        %v1237 = vadd.f32 %v1076, %v1236
        %v1238 = vpop.f32.mrf.mxu0
        %v1239 = vpop.f32.mrf.mxu0
        %v1240 = vadd.f32 %v1079, %v1239
        %v1241 = vpop.f32.mrf.mxu0
        %1242 = vmatprep.mubr.bf16.mxu0 %v712
        %1243 = vmatmul.mubr.bf16.gmra.mxu0 %v711
        %v1244 = vpop.f32.mrf.mxu0
        %v1245 = vadd.f32 %v1084, %v1244
        %v1246 = vpop.f32.mrf.mxu0
        %v1247 = vpop.f32.mrf.mxu0
        %v1248 = vadd.f32 %v1087, %v1247
        %v1249 = vpop.f32.mrf.mxu0
        %1250 = vmatprep.mubr.bf16.mxu0 %v716
        %1251 = vmatmul.mubr.bf16.gmra.mxu0 %v715
        %v1252 = vpop.f32.mrf.mxu0
        %v1253 = vadd.f32 %v1092, %v1252
        %v1254 = vpop.f32.mrf.mxu0
        %v1255 = vpop.f32.mrf.mxu0
        %v1256 = vadd.f32 %v1095, %v1255
        %v1257 = vpop.f32.mrf.mxu0
        %1258 = vmatprep.mubr.bf16.mxu0 %v720
        %1259 = vmatmul.mubr.bf16.gmra.mxu0 %v719
        %v1260 = vpop.f32.mrf.mxu0
        %v1261 = vadd.f32 %v1100, %v1260
        %v1262 = vpop.f32.mrf.mxu0
        %v1263 = vpop.f32.mrf.mxu0
        %v1264 = vadd.f32 %v1103, %v1263
        %v1265 = vpop.f32.mrf.mxu0
        %1266 = vmatprep.mubr.bf16.mxu0 %v724
        %1267 = vmatmul.mubr.bf16.gmra.mxu0 %v723
        %v1268 = vpop.f32.mrf.mxu0
        %v1269 = vadd.f32 %v1108, %v1268
        %v1270 = vpop.f32.mrf.mxu0
        %v1271 = vpop.f32.mrf.mxu0
        %v1272 = vadd.f32 %v1111, %v1271
        %v1273 = vpop.f32.mrf.mxu0
        %1274 = vmatprep.mubr.bf16.mxu0 %v728
        %1275 = vmatmul.mubr.bf16.gmra.mxu0 %v727
        %v1276 = vpop.f32.mrf.mxu0
        %v1277 = vadd.f32 %v1116, %v1276
        %v1278 = vpop.f32.mrf.mxu0
        %v1279 = vpop.f32.mrf.mxu0
        %v1280 = vadd.f32 %v1119, %v1279
        %v1281 = vpop.f32.mrf.mxu0
        %1282 = vmatprep.mubr.bf16.mxu0 %v732
        %1283 = vmatmul.mubr.bf16.gmra.mxu0 %v731
        %v1284 = vpop.f32.mrf.mxu0
        %v1285 = vadd.f32 %v1124, %v1284
        %v1286 = vpop.f32.mrf.mxu0
        %v1287 = vpop.f32.mrf.mxu0
        %v1288 = vadd.f32 %v1127, %v1287
        %v1289 = vpop.f32.mrf.mxu0
        %1290 = vmatprep.mubr.bf16.mxu0 %v736
        %1291 = vmatmul.mubr.bf16.gmra.mxu0 %v735
        %v1292 = vpop.f32.mrf.mxu0
        %v1293 = vadd.f32 %v1132, %v1292
        %v1294 = vpop.f32.mrf.mxu0
        %v1295 = vpop.f32.mrf.mxu0
        %v1296 = vadd.f32 %v1135, %v1295
        %v1297 = vpop.f32.mrf.mxu0
        %1298 = vmatprep.mubr.bf16.mxu0 %v740
        %1299 = vmatmul.mubr.bf16.gmra.mxu0 %v739
        %v1300 = vpop.f32.mrf.mxu0
        %v1301 = vadd.f32 %v1140, %v1300
        %v1302 = vpop.f32.mrf.mxu0
        %v1303 = vpop.f32.mrf.mxu0
        %v1304 = vadd.f32 %v1143, %v1303
        %v1305 = vpop.f32.mrf.mxu0
        %1306 = vmatprep.mubr.bf16.mxu0 %v744
        %1307 = vmatmul.mubr.bf16.gmra.mxu0 %v743
        %v1308 = vpop.f32.mrf.mxu0
        %v1309 = vadd.f32 %v1148, %v1308
        %v1310 = vpop.f32.mrf.mxu0
        %v1311 = vpop.f32.mrf.mxu0
        %v1312 = vadd.f32 %v1151, %v1311
        %v1313 = vpop.f32.mrf.mxu0
        %1314 = vmatprep.mubr.bf16.mxu0 %v748
        %1315 = vmatmul.mubr.bf16.gmra.mxu0 %v747
        %v1316 = vpop.f32.mrf.mxu0
        %v1317 = vadd.f32 %v1156, %v1316
        %v1318 = vpop.f32.mrf.mxu0
        %v1319 = vpop.f32.mrf.mxu0
        %v1320 = vadd.f32 %v1159, %v1319
        %v1321 = vpop.f32.mrf.mxu0
        %1322 = vmatprep.mubr.bf16.mxu0 %v752
        %1323 = vmatmul.mubr.bf16.gmra.mxu0 %v751
        %v1324 = vpop.f32.mrf.mxu0
        %v1325 = vadd.f32 %v1164, %v1324
        %v1326 = vpop.f32.mrf.mxu0
        %v1327 = vpop.f32.mrf.mxu0
        %v1328 = vadd.f32 %v1167, %v1327
        %v1329 = vpop.f32.mrf.mxu0
        %1330 = vdwg.mxu0
        %v1331 = vadd.f32 %v337, %v1205
        %v1332 = vadd.f32 %v338, %v1208
        %v1333 = vadd.f32 %v339, %v1213
        %v1334 = vadd.f32 %v340, %v1216
        %v1335 = vadd.f32 %v341, %v1221
        %v1336 = vadd.f32 %v342, %v1224
        %v1337 = vadd.f32 %v343, %v1229
        %v1338 = vadd.f32 %v344, %v1232
        %v1339 = vadd.f32 %v345, %v1237
        %v1340 = vadd.f32 %v346, %v1240
        %v1341 = vadd.f32 %v347, %v1245
        %v1342 = vadd.f32 %v348, %v1248
        %v1343 = vadd.f32 %v349, %v1253
        %v1344 = vadd.f32 %v350, %v1256
        %v1345 = vadd.f32 %v351, %v1261
        %v1346 = vadd.f32 %v352, %v1264
        %v1347 = vadd.f32 %v353, %v1269
        %v1348 = vadd.f32 %v354, %v1272
        %v1349 = vadd.f32 %v355, %v1277
        %v1350 = vadd.f32 %v356, %v1280
        %v1351 = vadd.f32 %v357, %v1285
        %v1352 = vadd.f32 %v358, %v1288
        %v1353 = vadd.f32 %v359, %v1293
        %v1354 = vadd.f32 %v360, %v1296
        %v1355 = vadd.f32 %v361, %v1301
        %v1356 = vadd.f32 %v362, %v1304
        %v1357 = vadd.f32 %v363, %v1309
        %v1358 = vadd.f32 %v364, %v1312
        %v1359 = vadd.f32 %v365, %v1317
        %v1360 = vadd.f32 %v366, %v1320
        %v1361 = vadd.f32 %v367, %v1325
        %v1362 = vadd.f32 %v368, %v1328
        %1363 = vst [vmem:[#allocation2] sm:$0xff] %v1331
        %1364 = vst [vmem:[#allocation2 + $0x8] sm:$0xff] %v1332
        %1365 = vst [vmem:[#allocation2 + $0x10] sm:$0xff] %v1333
        %1366 = vst [vmem:[#allocation2 + $0x18] sm:$0xff] %v1334
        %1367 = vst [vmem:[#allocation2 + $0x20] sm:$0xff] %v1335
        %1368 = vst [vmem:[#allocation2 + $0x28] sm:$0xff] %v1336
        %1369 = vst [vmem:[#allocation2 + $0x30] sm:$0xff] %v1337
        %1370 = vst [vmem:[#allocation2 + $0x38] sm:$0xff] %v1338
        %1371 = vst [vmem:[#allocation2 + $0x40] sm:$0xff] %v1339
        %1372 = vst [vmem:[#allocation2 + $0x48] sm:$0xff] %v1340
        %1373 = vst [vmem:[#allocation2 + $0x50] sm:$0xff] %v1341
        %1374 = vst [vmem:[#allocation2 + $0x58] sm:$0xff] %v1342
        %1375 = vst [vmem:[#allocation2 + $0x60] sm:$0xff] %v1343
        %1376 = vst [vmem:[#allocation2 + $0x68] sm:$0xff] %v1344
        %1377 = vst [vmem:[#allocation2 + $0x70] sm:$0xff] %v1345
        %1378 = vst [vmem:[#allocation2 + $0x78] sm:$0xff] %v1346
        %1379 = vst [vmem:[#allocation2 + $0x80] sm:$0xff] %v1347
        %1380 = vst [vmem:[#allocation2 + $0x88] sm:$0xff] %v1348
        %1381 = vst [vmem:[#allocation2 + $0x90] sm:$0xff] %v1349
        %1382 = vst [vmem:[#allocation2 + $0x98] sm:$0xff] %v1350
        %1383 = vst [vmem:[#allocation2 + $0xa0] sm:$0xff] %v1351
        %1384 = vst [vmem:[#allocation2 + $0xa8] sm:$0xff] %v1352
        %1385 = vst [vmem:[#allocation2 + $0xb0] sm:$0xff] %v1353
        %1386 = vst [vmem:[#allocation2 + $0xb8] sm:$0xff] %v1354
        %1387 = vst [vmem:[#allocation2 + $0xc0] sm:$0xff] %v1355
        %1388 = vst [vmem:[#allocation2 + $0xc8] sm:$0xff] %v1356
        %1389 = vst [vmem:[#allocation2 + $0xd0] sm:$0xff] %v1357
        %1390 = vst [vmem:[#allocation2 + $0xd8] sm:$0xff] %v1358
        %1391 = vst [vmem:[#allocation2 + $0xe0] sm:$0xff] %v1359
        %1392 = vst [vmem:[#allocation2 + $0xe8] sm:$0xff] %v1360
        %1393 = vst [vmem:[#allocation2 + $0xf0] sm:$0xff] %v1361
        %1394 = vst [vmem:[#allocation2 + $0xf8] sm:$0xff] %v1362
        // Predicated region
        $region49: #{tpu_custom_call.1} parent=35 // pred_check
          %p1395 = pneg %p301
        $region50: #{tpu_custom_call.1} parent=35 // pred_check_branch
          %1397 = sbr.rel (%p1395) target = $region52
        $region51: #{tpu_custom_call.1} parent=35 // pred_region
          %v1398 = vld [vmem:[#allocation2] sm:$0xff]
          %v1399 = vld [vmem:[#allocation2 + $0x8] sm:$0xff]
          %v1400 = vld [vmem:[#allocation2 + $0x10] sm:$0xff]
          %v1401 = vld [vmem:[#allocation2 + $0x18] sm:$0xff]
          %v1402 = vld [vmem:[#allocation2 + $0x20] sm:$0xff]
          %v1403 = vld [vmem:[#allocation2 + $0x28] sm:$0xff]
          %v1404 = vld [vmem:[#allocation2 + $0x30] sm:$0xff]
          %v1405 = vld [vmem:[#allocation2 + $0x38] sm:$0xff]
          %v1406 = vld [vmem:[#allocation2 + $0x40] sm:$0xff]
          %v1407 = vld [vmem:[#allocation2 + $0x48] sm:$0xff]
          %v1408 = vld [vmem:[#allocation2 + $0x50] sm:$0xff]
          %v1409 = vld [vmem:[#allocation2 + $0x58] sm:$0xff]
          %v1410 = vld [vmem:[#allocation2 + $0x60] sm:$0xff]
          %v1411 = vld [vmem:[#allocation2 + $0x68] sm:$0xff]
          %v1412 = vld [vmem:[#allocation2 + $0x70] sm:$0xff]
          %v1413 = vld [vmem:[#allocation2 + $0x78] sm:$0xff]
          %v1414 = vld [vmem:[#allocation2 + $0x80] sm:$0xff]
          %v1415 = vld [vmem:[#allocation2 + $0x88] sm:$0xff]
          %v1416 = vld [vmem:[#allocation2 + $0x90] sm:$0xff]
          %v1417 = vld [vmem:[#allocation2 + $0x98] sm:$0xff]
          %v1418 = vld [vmem:[#allocation2 + $0xa0] sm:$0xff]
          %v1419 = vld [vmem:[#allocation2 + $0xa8] sm:$0xff]
          %v1420 = vld [vmem:[#allocation2 + $0xb0] sm:$0xff]
          %v1421 = vld [vmem:[#allocation2 + $0xb8] sm:$0xff]
          %v1422 = vld [vmem:[#allocation2 + $0xc0] sm:$0xff]
          %v1423 = vld [vmem:[#allocation2 + $0xc8] sm:$0xff]
          %v1424 = vld [vmem:[#allocation2 + $0xd0] sm:$0xff]
          %v1425 = vld [vmem:[#allocation2 + $0xd8] sm:$0xff]
          %v1426 = vld [vmem:[#allocation2 + $0xe0] sm:$0xff]
          %v1427 = vld [vmem:[#allocation2 + $0xe8] sm:$0xff]
          %v1428 = vld [vmem:[#allocation2 + $0xf0] sm:$0xff]
          %v1429 = vld [vmem:[#allocation2 + $0xf8] sm:$0xff]
          %v1430 = vld [vmem:[%s295] sm:$0x1]
          %v1432 = vlaneseq
          %v1433 = vshrl.u32 %v1432, 7
          %v1434 = vsub.s32 0, %v1433
          %v1435 = vrot.slane %v1430, %v1434
          %v1437 = vmul.f32 %v1398, %v1435
          %v1438 = vmul.f32 %v1399, %v1435
          %v1439 = vmul.f32 %v1400, %v1435
          %v1440 = vmul.f32 %v1401, %v1435
          %v1441 = vmul.f32 %v1402, %v1435
          %v1442 = vmul.f32 %v1403, %v1435
          %v1443 = vmul.f32 %v1404, %v1435
          %v1444 = vmul.f32 %v1405, %v1435
          %v1445 = vmul.f32 %v1406, %v1435
          %v1446 = vmul.f32 %v1407, %v1435
          %v1447 = vmul.f32 %v1408, %v1435
          %v1448 = vmul.f32 %v1409, %v1435
          %v1449 = vmul.f32 %v1410, %v1435
          %v1450 = vmul.f32 %v1411, %v1435
          %v1451 = vmul.f32 %v1412, %v1435
          %v1452 = vmul.f32 %v1413, %v1435
          %v1453 = vmul.f32 %v1414, %v1435
          %v1454 = vmul.f32 %v1415, %v1435
          %v1455 = vmul.f32 %v1416, %v1435
          %v1456 = vmul.f32 %v1417, %v1435
          %v1457 = vmul.f32 %v1418, %v1435
          %v1458 = vmul.f32 %v1419, %v1435
          %v1459 = vmul.f32 %v1420, %v1435
          %v1460 = vmul.f32 %v1421, %v1435
          %v1461 = vmul.f32 %v1422, %v1435
          %v1462 = vmul.f32 %v1423, %v1435
          %v1463 = vmul.f32 %v1424, %v1435
          %v1464 = vmul.f32 %v1425, %v1435
          %v1465 = vmul.f32 %v1426, %v1435
          %v1466 = vmul.f32 %v1427, %v1435
          %v1467 = vmul.f32 %v1428, %v1435
          %v1468 = vmul.f32 %v1429, %v1435
          %v1469 = vld [vmem:[%s298] sm:$0x1]
          %v1471 = vlaneseq
          %v1472 = vshrl.u32 %v1471, 7
          %v1473 = vsub.s32 0, %v1472
          %v1474 = vrot.slane %v1469, %v1473
          %v1476 = vadd.f32 %v1437, %v1474
          %v1477 = vadd.f32 %v1438, %v1474
          %v1478 = vadd.f32 %v1439, %v1474
          %v1479 = vadd.f32 %v1440, %v1474
          %v1480 = vadd.f32 %v1441, %v1474
          %v1481 = vadd.f32 %v1442, %v1474
          %v1482 = vadd.f32 %v1443, %v1474
          %v1483 = vadd.f32 %v1444, %v1474
          %v1484 = vadd.f32 %v1445, %v1474
          %v1485 = vadd.f32 %v1446, %v1474
          %v1486 = vadd.f32 %v1447, %v1474
          %v1487 = vadd.f32 %v1448, %v1474
          %v1488 = vadd.f32 %v1449, %v1474
          %v1489 = vadd.f32 %v1450, %v1474
          %v1490 = vadd.f32 %v1451, %v1474
          %v1491 = vadd.f32 %v1452, %v1474
          %v1492 = vadd.f32 %v1453, %v1474
          %v1493 = vadd.f32 %v1454, %v1474
          %v1494 = vadd.f32 %v1455, %v1474
          %v1495 = vadd.f32 %v1456, %v1474
          %v1496 = vadd.f32 %v1457, %v1474
          %v1497 = vadd.f32 %v1458, %v1474
          %v1498 = vadd.f32 %v1459, %v1474
          %v1499 = vadd.f32 %v1460, %v1474
          %v1500 = vadd.f32 %v1461, %v1474
          %v1501 = vadd.f32 %v1462, %v1474
          %v1502 = vadd.f32 %v1463, %v1474
          %v1503 = vadd.f32 %v1464, %v1474
          %v1504 = vadd.f32 %v1465, %v1474
          %v1505 = vadd.f32 %v1466, %v1474
          %v1506 = vadd.f32 %v1467, %v1474
          %v1507 = vadd.f32 %v1468, %v1474
          %v1508 = vmax.f32 %v1476, 0.0
          %v1509 = vmax.f32 %v1477, 0.0
          %v1510 = vmax.f32 %v1478, 0.0
          %v1511 = vmax.f32 %v1479, 0.0
          %v1512 = vmax.f32 %v1480, 0.0
          %v1513 = vmax.f32 %v1481, 0.0
          %v1514 = vmax.f32 %v1482, 0.0
          %v1515 = vmax.f32 %v1483, 0.0
          %v1516 = vmax.f32 %v1484, 0.0
          %v1517 = vmax.f32 %v1485, 0.0
          %v1518 = vmax.f32 %v1486, 0.0
          %v1519 = vmax.f32 %v1487, 0.0
          %v1520 = vmax.f32 %v1488, 0.0
          %v1521 = vmax.f32 %v1489, 0.0
          %v1522 = vmax.f32 %v1490, 0.0
          %v1523 = vmax.f32 %v1491, 0.0
          %v1524 = vmax.f32 %v1492, 0.0
          %v1525 = vmax.f32 %v1493, 0.0
          %v1526 = vmax.f32 %v1494, 0.0
          %v1527 = vmax.f32 %v1495, 0.0
          %v1528 = vmax.f32 %v1496, 0.0
          %v1529 = vmax.f32 %v1497, 0.0
          %v1530 = vmax.f32 %v1498, 0.0
          %v1531 = vmax.f32 %v1499, 0.0
          %v1532 = vmax.f32 %v1500, 0.0
          %v1533 = vmax.f32 %v1501, 0.0
          %v1534 = vmax.f32 %v1502, 0.0
          %v1535 = vmax.f32 %v1503, 0.0
          %v1536 = vmax.f32 %v1504, 0.0
          %v1537 = vmax.f32 %v1505, 0.0
          %v1538 = vmax.f32 %v1506, 0.0
          %v1539 = vmax.f32 %v1507, 0.0
          %v1540 = vpack.c.bf16 %v1509, %v1508
          %v1541 = vpack.c.bf16 %v1511, %v1510
          %v1542 = vpack.c.bf16 %v1513, %v1512
          %v1543 = vpack.c.bf16 %v1515, %v1514
          %v1544 = vpack.c.bf16 %v1517, %v1516
          %v1545 = vpack.c.bf16 %v1519, %v1518
          %v1546 = vpack.c.bf16 %v1521, %v1520
          %v1547 = vpack.c.bf16 %v1523, %v1522
          %v1548 = vpack.c.bf16 %v1525, %v1524
          %v1549 = vpack.c.bf16 %v1527, %v1526
          %v1550 = vpack.c.bf16 %v1529, %v1528
          %v1551 = vpack.c.bf16 %v1531, %v1530
          %v1552 = vpack.c.bf16 %v1533, %v1532
          %v1553 = vpack.c.bf16 %v1535, %v1534
          %v1554 = vpack.c.bf16 %v1537, %v1536
          %v1555 = vpack.c.bf16 %v1539, %v1538
          %v1572 = vunpack.c.l.b16 %v1540
          %v1573 = vunpack.c.h.b16 %v1540
          %v1574 = vunpack.c.l.b16 %v1541
          %v1575 = vunpack.c.h.b16 %v1541
          %v1576 = vunpack.c.l.b16 %v1542
          %v1577 = vunpack.c.h.b16 %v1542
          %v1578 = vunpack.c.l.b16 %v1543
          %v1579 = vunpack.c.h.b16 %v1543
          %v1580 = vunpack.c.l.b16 %v1544
          %v1581 = vunpack.c.h.b16 %v1544
          %v1582 = vunpack.c.l.b16 %v1545
          %v1583 = vunpack.c.h.b16 %v1545
          %v1584 = vunpack.c.l.b16 %v1546
          %v1585 = vunpack.c.h.b16 %v1546
          %v1586 = vunpack.c.l.b16 %v1547
          %v1587 = vunpack.c.h.b16 %v1547
          %v1588 = vunpack.c.l.b16 %v1548
          %v1589 = vunpack.c.h.b16 %v1548
          %v1590 = vunpack.c.l.b16 %v1549
          %v1591 = vunpack.c.h.b16 %v1549
          %v1592 = vunpack.c.l.b16 %v1550
          %v1593 = vunpack.c.h.b16 %v1550
          %v1594 = vunpack.c.l.b16 %v1551
          %v1595 = vunpack.c.h.b16 %v1551
          %v1596 = vunpack.c.l.b16 %v1552
          %v1597 = vunpack.c.h.b16 %v1552
          %v1598 = vunpack.c.l.b16 %v1553
          %v1599 = vunpack.c.h.b16 %v1553
          %v1600 = vunpack.c.l.b16 %v1554
          %v1601 = vunpack.c.h.b16 %v1554
          %v1602 = vunpack.c.l.b16 %v1555
          %v1603 = vunpack.c.h.b16 %v1555
          %v1604 = vpack.c.b16 %v1572, %v1572
          %v1605 = vpack.c.b16 %v1573, %v1573
          %v1606 = vpack.c.b16 %v1574, %v1574
          %v1607 = vpack.c.b16 %v1575, %v1575
          %v1608 = vpack.c.b16 %v1576, %v1576
          %v1609 = vpack.c.b16 %v1577, %v1577
          %v1610 = vpack.c.b16 %v1578, %v1578
          %v1611 = vpack.c.b16 %v1579, %v1579
          %v1612 = vpack.c.b16 %v1580, %v1580
          %v1613 = vpack.c.b16 %v1581, %v1581
          %v1614 = vpack.c.b16 %v1582, %v1582
          %v1615 = vpack.c.b16 %v1583, %v1583
          %v1616 = vpack.c.b16 %v1584, %v1584
          %v1617 = vpack.c.b16 %v1585, %v1585
          %v1618 = vpack.c.b16 %v1586, %v1586
          %v1619 = vpack.c.b16 %v1587, %v1587
          %v1620 = vpack.c.b16 %v1588, %v1588
          %v1621 = vpack.c.b16 %v1589, %v1589
          %v1622 = vpack.c.b16 %v1590, %v1590
          %v1623 = vpack.c.b16 %v1591, %v1591
          %v1624 = vpack.c.b16 %v1592, %v1592
          %v1625 = vpack.c.b16 %v1593, %v1593
          %v1626 = vpack.c.b16 %v1594, %v1594
          %v1627 = vpack.c.b16 %v1595, %v1595
          %v1628 = vpack.c.b16 %v1596, %v1596
          %v1629 = vpack.c.b16 %v1597, %v1597
          %v1630 = vpack.c.b16 %v1598, %v1598
          %v1631 = vpack.c.b16 %v1599, %v1599
          %v1632 = vpack.c.b16 %v1600, %v1600
          %v1633 = vpack.c.b16 %v1601, %v1601
          %v1634 = vpack.c.b16 %v1602, %v1602
          %v1635 = vpack.c.b16 %v1603, %v1603
          %1668 = vst [vmem:[%s289] sm:$0xf] %v1604
          %1669 = vst [vmem:[%s289 + $0x4] sm:$0xf] %v1605
          %1670 = vst [vmem:[%s289 + $0x8] sm:$0xf] %v1606
          %1671 = vst [vmem:[%s289 + $0xc] sm:$0xf] %v1607
          %1672 = vst [vmem:[%s289 + $0x10] sm:$0xf] %v1608
          %1673 = vst [vmem:[%s289 + $0x14] sm:$0xf] %v1609
          %1674 = vst [vmem:[%s289 + $0x18] sm:$0xf] %v1610
          %1675 = vst [vmem:[%s289 + $0x1c] sm:$0xf] %v1611
          %1676 = vst [vmem:[%s289 + $0x20] sm:$0xf] %v1612
          %1677 = vst [vmem:[%s289 + $0x24] sm:$0xf] %v1613
          %1678 = vst [vmem:[%s289 + $0x28] sm:$0xf] %v1614
          %1679 = vst [vmem:[%s289 + $0x2c] sm:$0xf] %v1615
          %1680 = vst [vmem:[%s289 + $0x30] sm:$0xf] %v1616
          %1681 = vst [vmem:[%s289 + $0x34] sm:$0xf] %v1617
          %1682 = vst [vmem:[%s289 + $0x38] sm:$0xf] %v1618
          %1683 = vst [vmem:[%s289 + $0x3c] sm:$0xf] %v1619
          %1684 = vst [vmem:[%s289 + $0x40] sm:$0xf] %v1620
          %1685 = vst [vmem:[%s289 + $0x44] sm:$0xf] %v1621
          %1686 = vst [vmem:[%s289 + $0x48] sm:$0xf] %v1622
          %1687 = vst [vmem:[%s289 + $0x4c] sm:$0xf] %v1623
          %1688 = vst [vmem:[%s289 + $0x50] sm:$0xf] %v1624
          %1689 = vst [vmem:[%s289 + $0x54] sm:$0xf] %v1625
          %1690 = vst [vmem:[%s289 + $0x58] sm:$0xf] %v1626
          %1691 = vst [vmem:[%s289 + $0x5c] sm:$0xf] %v1627
          %1692 = vst [vmem:[%s289 + $0x60] sm:$0xf] %v1628
          %1693 = vst [vmem:[%s289 + $0x64] sm:$0xf] %v1629
          %1694 = vst [vmem:[%s289 + $0x68] sm:$0xf] %v1630
          %1695 = vst [vmem:[%s289 + $0x6c] sm:$0xf] %v1631
          %1696 = vst [vmem:[%s289 + $0x70] sm:$0xf] %v1632
          %1697 = vst [vmem:[%s289 + $0x74] sm:$0xf] %v1633
          %1698 = vst [vmem:[%s289 + $0x78] sm:$0xf] %v1634
          %1699 = vst [vmem:[%s289 + $0x7c] sm:$0xf] %v1635
        $region52: #{tpu_custom_call.1} parent=35 // pred_fallthru
          _
        %s1700 = sand.u32 %s159, 1
        %s1701 = scalar_lea.sflag [#allocation5], %s1700
        %s1702 = sand.u32 %s159, 1
        %s1703 = smul.addr %s1702, 128
        %s1704 = scalar_lea.vmem [#allocation8], %s1703
        // Predicated region
        $region53: #{tpu_custom_call.1} parent=35 // pred_check
          %p1705 = pneg %p169
        $region54: #{tpu_custom_call.1} parent=35 // pred_check_branch
          %1707 = sbr.rel (%p1705) target = $region56
        $region55: #{tpu_custom_call.1} parent=35 // pred_region
          %s1708 = smul.u32 32, %s27
          %s1710 = ssub.s32 2048, 2048
          %1711 = vsyncadd %s1701, %s1710
          %s1712 = sadd.s32 %s28, %s1708
          %s1713 = smul.addr %s1712, 64
          %s1714 = scalar_lea.hbm %s4, %s1713
          %s1715 = sshll.u32 %s1704, 4
          %s1716 = int_to_ptr.vmem [resolvable:$true] %s1715
          %1721 = dma.vmem_to_hbm [thread:$0]  %s1716, 2048, %s1714, %s1701, 64, 64, 4
        $region56: #{tpu_custom_call.1} parent=35 // pred_fallthru
          _
      $region36: #{tpu_custom_call.1} parent=5 // pred_fallthru
        _
      %p1722 = scmp.le.s32.totalorder 2, %s17
      // Predicated region
      $region57: #{tpu_custom_call.1} parent=5 // pred_check
        %p1723 = pneg %p1722
      $region58: #{tpu_custom_call.1} parent=5 // pred_check_branch
        %1725 = sbr.rel (%p1723) target = $region60
      $region59: #{tpu_custom_call.1} parent=5 // pred_region
        %s1726 = ssub.s32 %s17, 2
        // Predicated region
        $region61: #{tpu_custom_call.1} parent=59 // pred_check
          %p1727 = pneg %p175
        $region62: #{tpu_custom_call.1} parent=59 // pred_check_branch
          %1729 = sbr.rel (%p1727) target = $region64
        $region63: #{tpu_custom_call.1} parent=59 // pred_region
          %s1730 = sand.u32 %s160, 1
          %s1731 = scalar_lea.sflag [#allocation5], %s1730
          %s1732 = sand.u32 %s160, 1
          %s1733 = smul.addr %s1732, 128
          %s1734 = scalar_lea.vmem [#allocation8], %s1733
          %1735 = dma.done %s1731, 2048
        $region64: #{tpu_custom_call.1} parent=59 // pred_fallthru
          _
      $region60: #{tpu_custom_call.1} parent=5 // pred_fallthru
        _
    $region6: #{tpu_custom_call.1} parent=1 // loop_footer
      %s21 = sadd.s32 1, %s17
    $region7: #{tpu_custom_call.1} parent=1 // loop_footer_branch
      %16 = sbr.rel target = $region3
    $region8: #{tpu_custom_call.1} parent=1 // loop_exit
      _
    %1736 = vsyncpa [#allocation4], 1
    %s1737 = scalar_lea.sflag [#allocation4], 1
    %1738 = vsyncpa %s1737, 1
    %1739 = vsyncpa [#allocation7], 1
    %1740 = vsyncpa [#allocation5], 1
    %s1741 = scalar_lea.sflag [#allocation5], 1
    %1742 = vsyncpa %s1741, 1

</llo_original>
